<compile_context>
chip_gen: v7x
topology: tpu7x:2x2x1
jax: 0.10.0
libtpu: 0.0.40
codegen_flags: <defaults>
</compile_context>

<pallas_src>
import functools

import jax
import jax.numpy as jnp
from jax.experimental import pallas as pl
from jax.experimental.pallas import tpu as pltpu


def _round_up(a: int, b: int) -> int:
    return (a + b - 1) // b * b


# ----------------------------------------------------------------------------
# Fused kernel: routed experts + shared-expert MLP, accumulated in out_ref
#   grid = (num_token_tiles, n_experts); expert axis is the inner reduction axis
# ----------------------------------------------------------------------------
def moe_fused_kernel(order_ref,                      # SMEM (E,)        int32 (prefetch)
                     mask_ref,                       # SMEM (nt*E,)     int32 (prefetch)
                     x_ref,                          # VMEM (TM, D)     bf16
                     idx_ref,                        # VMEM (TM, K)     int32
                     tkw_ref,                        # VMEM (TM, K)     f32
                     w1_ref, w3_ref,                 # VMEM (D, I)      bf16  (expert slot)
                     w2_ref,                         # VMEM (I, D)      bf16  (expert slot)
                     s1_ref, s3_ref,                 # VMEM (D, Is)     bf16  (shared)
                     s2_ref,                         # VMEM (Is, D)     bf16  (shared)
                     out_ref):                       # VMEM (TM, D)     f32 (accumulator)
    t = pl.program_id(0)
    e = pl.program_id(1)
    n_e = pl.num_programs(1)

    @pl.when(e == 0)
    def _init():
        out_ref[...] = jnp.zeros_like(out_ref)

    # ---- routed expert slot e: skip the matmuls if this token tile has no token
    #      routed to it (mask already zero for slots >= n_active) -----------------
    @pl.when(mask_ref[t * n_e + e] > 0)
    def _expert():
        eg = order_ref[e]                            # actual expert id for this slot
        x = x_ref[...]                                                  # bf16
        h1 = jnp.dot(x, w1_ref[...], preferred_element_type=jnp.float32)
        h3 = jnp.dot(x, w3_ref[...], preferred_element_type=jnp.float32)
        g = (h1 * jax.nn.sigmoid(h1)) * h3                              # silu(h1)*h3, f32
        y_e = jnp.dot(g.astype(jnp.bfloat16), w2_ref[...],
                      preferred_element_type=jnp.float32)               # (TM, D) f32
        # per-token gate weight of expert eg (0 if eg not in that token's top-k)
        sel = (idx_ref[...] == eg).astype(jnp.float32)                  # (TM, K)
        gw = jnp.sum(tkw_ref[...] * sel, axis=-1, keepdims=True)        # (TM, 1)
        out_ref[...] += gw * y_e

    # ---- last expert step: fuse shared-expert MLP + residual ------------------
    @pl.when(e == n_e - 1)
    def _finalize():
        x = x_ref[...]
        h1 = jnp.dot(x, s1_ref[...], preferred_element_type=jnp.float32)
        h3 = jnp.dot(x, s3_ref[...], preferred_element_type=jnp.float32)
        g = (h1 * jax.nn.sigmoid(h1)) * h3
        out_ref[...] += jnp.dot(g.astype(jnp.bfloat16), s2_ref[...],
                                preferred_element_type=jnp.float32)


# ----------------------------------------------------------------------------
# Wrapper
# ----------------------------------------------------------------------------
def moe_forward(x, params, *, n_activated_experts, token_tile=512,
                min_token_tiles=1):
    """x: [B, S, D] float32 -> y: [B, S, D] float32.

    min_token_tiles=2 is recommended on v7x (2 TensorCores per chip) so the
    'parallel' token axis can be sharded across both cores.
    """
    B, S, D = x.shape
    T = B * S
    K = n_activated_experts

    wg_t = params["gate_w_t"]                                 # (D, E)  f32
    w1_t = params["expert_w1_t"].astype(jnp.bfloat16)         # (E, D, I)
    w3_t = params["expert_w3_t"].astype(jnp.bfloat16)         # (E, D, I)
    w2_t = params["expert_w2_t"].astype(jnp.bfloat16)         # (E, I, D)
    s1_t = params["shared_w1_t"].astype(jnp.bfloat16)         # (D, Is)
    s3_t = params["shared_w3_t"].astype(jnp.bfloat16)         # (D, Is)
    s2_t = params["shared_w2_t"].astype(jnp.bfloat16)         # (Is, D)

    E = wg_t.shape[1]
    I = w1_t.shape[2]
    Is = s1_t.shape[1]

    # ---- single bf16 copy of x feeds both the gate and the fused kernel -------
    xb = x.reshape(T, D).astype(jnp.bfloat16)

    # ---- gate: logits + softmax + top-k (tiny, lane-sparse E -> plain JAX) ----
    logits = jnp.dot(xb, wg_t.astype(jnp.bfloat16),
                     preferred_element_type=jnp.float32)
    scores = jax.nn.softmax(logits, axis=-1)
    topk_weight, topk_idx = jax.lax.top_k(scores, K)          # (T, K) f32 / int32
    if K > 1:
        topk_weight = topk_weight / (
            jnp.sum(topk_weight, axis=-1, keepdims=True) + 1e-20)
    topk_idx = topk_idx.astype(jnp.int32)

    # ---- token tiling: multiple of 16 rows (bf16 sublane packing) -------------
    TM = max(16, min(_round_up(token_tile, 16), _round_up(T, 16)))
    if min_token_tiles > 1:                       # v7x: feed both TensorCores
        while TM > 16 and _round_up(T, TM) // TM < min_token_tiles:
            TM = max(16, _round_up(TM // 2, 16))
    Tp = _round_up(T, TM)
    num_tiles = Tp // TM
    pad = Tp - T

    xp = jnp.pad(xb, ((0, pad), (0, 0)))
    idx_p = jnp.pad(topk_idx, ((0, pad), (0, 0)), constant_values=-1)   # pad matches nothing
    tkw_p = jnp.pad(topk_weight, ((0, pad), (0, 0)))                    # pad weight 0

    # ---- expert activity: DMA-skip order + per-tile compute mask --------------
    counts = jnp.zeros((E,), jnp.int32).at[topk_idx.reshape(-1)].add(1)
    active = counts > 0
    n_active = jnp.sum(active.astype(jnp.int32))
    order = jnp.argsort(jnp.logical_not(active).astype(jnp.int32)).astype(jnp.int32)
    last_active = jnp.take(order, jnp.maximum(n_active - 1, 0))
    slot = jnp.arange(E, dtype=jnp.int32)
    # trailing (inactive) slots repeat the last active expert -> weight DMA elided
    order_dma = jnp.where(slot < n_active, order, last_active).astype(jnp.int32)

    sel_any = (idx_p[:, :, None] == jnp.arange(E)[None, None, :]).any(axis=1)   # (Tp, E)
    tile_active = sel_any.reshape(num_tiles, TM, E).any(axis=1)                 # (nt, E)
    tile_mask = (jnp.take(tile_active, order, axis=1)
                 & (slot < n_active)[None, :]).astype(jnp.int32).reshape(-1)    # (nt*E,)

    # ---- VMEM budget (actual resident set + headroom) -------------------------
    vmem_need = (
        2 * TM * D * 2            # x tile (bf16), double-buffered over token tiles
        + 2 * TM * K * 8          # top-k idx (i32) + weight (f32) tiles
        + 2 * 3 * D * I * 2       # routed expert W1/W3/W2, double-buffered over e
        + 3 * D * Is * 2          # shared weights, single-buffered (Buffered(1))
        + 2 * TM * D * 4          # f32 output tile, double-buffered over token tiles
    )
    vmem_limit = min(int(vmem_need * 1.25) + (4 << 20), 128 * 1024 * 1024)

    grid_spec = pltpu.PrefetchScalarGridSpec(
        num_scalar_prefetch=2,
        grid=(num_tiles, E),
        in_specs=[
            pl.BlockSpec((TM, D), lambda t, e, o, m: (t, 0)),                     # x (bf16)
            pl.BlockSpec((TM, K), lambda t, e, o, m: (t, 0)),                     # topk_idx
            pl.BlockSpec((TM, K), lambda t, e, o, m: (t, 0)),                     # topk_weight
            pl.BlockSpec((pl.Squeezed(), D, I), lambda t, e, o, m: (o[e], 0, 0)),  # W1[slot]
            pl.BlockSpec((pl.Squeezed(), D, I), lambda t, e, o, m: (o[e], 0, 0)),  # W3[slot]
            pl.BlockSpec((pl.Squeezed(), I, D), lambda t, e, o, m: (o[e], 0, 0)),  # W2[slot]
            pl.BlockSpec((D, Is), lambda t, e, o, m: (0, 0),
                         pipeline_mode=pl.Buffered(1)),                           # shared W1
            pl.BlockSpec((D, Is), lambda t, e, o, m: (0, 0),
                         pipeline_mode=pl.Buffered(1)),                           # shared W3
            pl.BlockSpec((Is, D), lambda t, e, o, m: (0, 0),
                         pipeline_mode=pl.Buffered(1)),                           # shared W2
        ],
        out_specs=pl.BlockSpec((TM, D), lambda t, e, o, m: (t, 0)),
    )

    y = pl.pallas_call(
        moe_fused_kernel,
        out_shape=jax.ShapeDtypeStruct((Tp, D), jnp.float32),
        grid_spec=grid_spec,
        compiler_params=pltpu.CompilerParams(
            dimension_semantics=("parallel", "arbitrary"),
            vmem_limit_bytes=vmem_limit),
    )(order_dma, tile_mask, xp, idx_p, tkw_p,
      w1_t, w3_t, w2_t, s1_t, s3_t, s2_t)

    return y[:T].reshape(B, S, D)


# ----------------------------------------------------------------------------
# Plain-JAX reference mirroring the kernel's precision choices (for testing)
# ----------------------------------------------------------------------------
def moe_reference(x, params, *, n_activated_experts):
    B, S, D = x.shape
    T = B * S
    K = n_activated_experts
    xf = x.reshape(T, D).astype(jnp.bfloat16).astype(jnp.float32)

    wg = params["gate_w_t"].astype(jnp.bfloat16).astype(jnp.float32)
    logits = xf @ wg
    scores = jax.nn.softmax(logits, axis=-1)
    tw, ti = jax.lax.top_k(scores, K)
    if K > 1:
        tw = tw / (jnp.sum(tw, axis=-1, keepdims=True) + 1e-20)

    E = wg.shape[1]
    w1 = params["expert_w1_t"].astype(jnp.bfloat16).astype(jnp.float32)
    w3 = params["expert_w3_t"].astype(jnp.bfloat16).astype(jnp.float32)
    w2 = params["expert_w2_t"].astype(jnp.bfloat16).astype(jnp.float32)

    y = jnp.zeros((T, D), jnp.float32)
    for e in range(E):
        h1 = xf @ w1[e]
        h3 = xf @ w3[e]
        g = (h1 * jax.nn.sigmoid(h1)) * h3
        ye = g.astype(jnp.bfloat16).astype(jnp.float32) @ w2[e]
        gw = jnp.sum(tw * (ti == e), axis=-1, keepdims=True)
        y = y + gw * ye

    s1 = params["shared_w1_t"].astype(jnp.bfloat16).astype(jnp.float32)
    s3 = params["shared_w3_t"].astype(jnp.bfloat16).astype(jnp.float32)
    s2 = params["shared_w2_t"].astype(jnp.bfloat16).astype(jnp.float32)
    h1 = xf @ s1
    h3 = xf @ s3
    g = (h1 * jax.nn.sigmoid(h1)) * h3
    y = y + g.astype(jnp.bfloat16).astype(jnp.float32) @ s2
    return y.reshape(B, S, D)


# ----------------------------------------------------------------------------
# Deterministic parameter init (shapes follow MoE.__init__)
# ----------------------------------------------------------------------------
def init_params(key, *, dim, moe_inter_dim, n_expert_groups, n_shared_experts):
    ks = jax.random.split(key, 8)
    Is = n_shared_experts * moe_inter_dim

    def linear_t(k, fan_in, fan_out):
        # nn.Linear-style uniform init, stored transposed as [in, out]
        bound = 1.0 / jnp.sqrt(fan_in)
        return jax.random.uniform(k, (fan_in, fan_out), jnp.float32,
                                  minval=-bound, maxval=bound)

    params = {
        # Gate.weight = randn(E, D)  -> stored transposed (D, E)
        "gate_w_t": jax.random.normal(ks[0], (n_expert_groups, dim),
                                      jnp.float32).T,
        # Experts: w1/w3: Linear(dim, inter), w2: Linear(inter, dim); stacked
        "expert_w1_t": jax.random.uniform(
            ks[1], (n_expert_groups, dim, moe_inter_dim), jnp.float32,
            minval=-1.0 / jnp.sqrt(dim), maxval=1.0 / jnp.sqrt(dim)),
        "expert_w3_t": jax.random.uniform(
            ks[2], (n_expert_groups, dim, moe_inter_dim), jnp.float32,
            minval=-1.0 / jnp.sqrt(dim), maxval=1.0 / jnp.sqrt(dim)),
        "expert_w2_t": jax.random.uniform(
            ks[3], (n_expert_groups, moe_inter_dim, dim), jnp.float32,
            minval=-1.0 / jnp.sqrt(moe_inter_dim),
            maxval=1.0 / jnp.sqrt(moe_inter_dim)),
        # Shared MLP: Linear(dim, Is), Linear(Is, dim), Linear(dim, Is)
        "shared_w1_t": linear_t(ks[4], dim, Is),
        "shared_w3_t": linear_t(ks[5], dim, Is),
        "shared_w2_t": linear_t(ks[6], Is, dim),
    }
    return params


if __name__ == "__main__":
    # Small config consistent with BirdMindConfig defaults (scaled down)
    DIM = 128
    MOE_INTER = 128
    N_EXPERTS = 6
    N_SHARED = 2
    TOP_K = 2

    key = jax.random.PRNGKey(0)
    k_x1, k_x2, k_p = jax.random.split(key, 3)
    params = init_params(k_p, dim=DIM, moe_inter_dim=MOE_INTER,
                         n_expert_groups=N_EXPERTS,
                         n_shared_experts=N_SHARED)

    # TODO(synk): training branch (aux_loss, repeat_interleave/scatter path) is not
    # implemented; this is the eval/inference path only (aux_loss == 0).

    # ---- case 1: tiny prefill (single token tile) -----------------------------
    B1, S1 = 2, 8
    x1 = jax.random.normal(k_x1, (B1, S1, DIM), jnp.float32)
    fwd1 = jax.jit(functools.partial(moe_forward, n_activated_experts=TOP_K))
    y1 = fwd1(x1, params)
    jax.block_until_ready(y1)
    assert y1.shape == (B1, S1, DIM) and y1.dtype == jnp.float32
    assert bool(jnp.isfinite(y1).all())
    r1 = moe_reference(x1, params, n_activated_experts=TOP_K)
    err1 = float(jnp.max(jnp.abs(y1 - r1)) / (jnp.max(jnp.abs(r1)) + 1e-6))
    assert err1 < 2e-2, f"case1 mismatch: rel err {err1}"

    # ---- case 2: multiple token tiles + padding + per-tile skip path ----------
    B2, S2 = 2, 70          # T = 140 -> TM = 48, 3 tiles, 4 padded rows
    x2 = jax.random.normal(k_x2, (B2, S2, DIM), jnp.float32)
    fwd2 = jax.jit(functools.partial(moe_forward, n_activated_experts=TOP_K,
                                     token_tile=48, min_token_tiles=2))
    y2 = fwd2(x2, params)
    jax.block_until_ready(y2)
    assert y2.shape == (B2, S2, DIM) and y2.dtype == jnp.float32
    assert bool(jnp.isfinite(y2).all())
    r2 = moe_reference(x2, params, n_activated_experts=TOP_K)
    err2 = float(jnp.max(jnp.abs(y2 - r2)) / (jnp.max(jnp.abs(r2)) + 1e-6))
    assert err2 < 2e-2, f"case2 mismatch: rel err {err2}"

    print("KERNEL_OK")
</pallas_src>

<mosaic_0001>
module attributes {stable_mosaic.version = 11 : i64} {
  func.func private @main(%arg0: i32) attributes {dimension_semantics = [#tpu.dimension_semantics<core_parallel>], iteration_bounds = array<i64: 2>, tpu.core_type = #tpu.core_type<sc_scalar_subcore>, window_params = []} {
    return
  }
}

module attributes {stable_mosaic.version = 11 : i64} {
  func.func private @main(%arg0: i32) attributes {dimension_semantics = [#tpu.dimension_semantics<core_parallel>], iteration_bounds = array<i64: 2>, tpu.core_type = #tpu.core_type<sc_scalar_subcore>, window_params = []} {
    return
  }
}

module attributes {stable_mosaic.version = 11 : i64} {
  func.func @moe_fused_kernel(%arg0: i32, %arg1: i32, %arg2: memref<6xi32, #tpu.memory_space<smem>>, %arg3: memref<6xi32, #tpu.memory_space<smem>>, %arg4: memref<16x128xbf16, #tpu.memory_space<vmem>>, %arg5: memref<16x2xi32, #tpu.memory_space<vmem>>, %arg6: memref<16x2xf32, #tpu.memory_space<vmem>>, %arg7: memref<1x128x128xbf16, #tpu.memory_space<vmem>>, %arg8: memref<1x128x128xbf16, #tpu.memory_space<vmem>>, %arg9: memref<1x128x128xbf16, #tpu.memory_space<vmem>>, %arg10: memref<128x256xbf16, #tpu.memory_space<vmem>>, %arg11: memref<128x256xbf16, #tpu.memory_space<vmem>>, %arg12: memref<256x128xbf16, #tpu.memory_space<vmem>>, %arg13: memref<16x128xf32, #tpu.memory_space<vmem>>) attributes {dimension_semantics = [#tpu.dimension_semantics<parallel>, #tpu.dimension_semantics<arbitrary>], iteration_bounds = array<i64: 1, 6>, scalar_prefetch = 2 : i64, scratch_operands = 0 : i64, tpu.core_type = #tpu.core_type<tc>, window_params = [{transform_indices = @transform_0, window_bounds = array<i64: 16, 128>}, {transform_indices = @transform_1, window_bounds = array<i64: 16, 2>}, {transform_indices = @transform_2, window_bounds = array<i64: 16, 2>}, {transform_indices = @transform_3, window_bounds = array<i64: 1, 128, 128>}, {transform_indices = @transform_4, window_bounds = array<i64: 1, 128, 128>}, {transform_indices = @transform_5, window_bounds = array<i64: 1, 128, 128>}, {pipeline_mode = #tpu.pipeline_mode<synchronous>, transform_indices = @transform_6, window_bounds = array<i64: 128, 256>}, {pipeline_mode = #tpu.pipeline_mode<synchronous>, transform_indices = @transform_7, window_bounds = array<i64: 128, 256>}, {pipeline_mode = #tpu.pipeline_mode<synchronous>, transform_indices = @transform_8, window_bounds = array<i64: 256, 128>}, {transform_indices = @transform_9, window_bounds = array<i64: 16, 128>}]} {
    %c0_i32 = arith.constant 0 : i32
    %0 = arith.cmpi eq, %arg1, %c0_i32 : i32
    %1 = arith.extui %0 : i1 to i32
    %c0_i32_0 = arith.constant 0 : i32
    %2 = arith.cmpi ne, %1, %c0_i32_0 : i32
    scf.if %2 {
      %cst = arith.constant 0.000000e+00 : f32
      %13 = vector.broadcast %cst : f32 to vector<16x128xf32>
      %c0 = arith.constant 0 : index
      %c0_4 = arith.constant 0 : index
      %14 = vector.load %arg13[%c0, %c0_4] : memref<16x128xf32, #tpu.memory_space<vmem>>, vector<16x128xf32>
      tpu.vector_store %arg13[%c0, %c0_4], %13 {strides = array<i32>} : memref<16x128xf32, #tpu.memory_space<vmem>>, vector<16x128xf32>,
    } else {
    }
    %c6_i32 = arith.constant 6 : i32
    %3 = arith.muli %arg0, %c6_i32 : i32
    %4 = arith.addi %3, %arg1 : i32
    %5 = arith.index_cast %4 : i32 to index
    %6 = memref.load %arg3[%5] : memref<6xi32, #tpu.memory_space<smem>>
    %c0_i32_1 = arith.constant 0 : i32
    %7 = arith.cmpi sgt, %6, %c0_i32_1 : i32
    %8 = arith.extui %7 : i1 to i32
    %c0_i32_2 = arith.constant 0 : i32
    %9 = arith.cmpi ne, %8, %c0_i32_2 : i32
    scf.if %9 {
      %13 = arith.index_cast %arg1 : i32 to index
      %14 = memref.load %arg2[%13] : memref<6xi32, #tpu.memory_space<smem>>
      %c0 = arith.constant 0 : index
      %c0_4 = arith.constant 0 : index
      %15 = vector.load %arg4[%c0, %c0_4] : memref<16x128xbf16, #tpu.memory_space<vmem>>, vector<16x128xbf16>
      %c0_5 = arith.constant 0 : index
      %c0_6 = arith.constant 0 : index
      %c0_7 = arith.constant 0 : index
      %16 = vector.load %arg7[%c0_5, %c0_6, %c0_7] : memref<1x128x128xbf16, #tpu.memory_space<vmem>>, vector<1x128x128xbf16>
      %17 = vector.shape_cast %16 : vector<1x128x128xbf16> to vector<128x128xbf16>
      %cst = arith.constant dense<0.000000e+00> : vector<16x128xf32>
      %18 = tpu.matmul %15, %17, %cst {dimension_numbers = #tpu.dot_dimension_numbers<[1], [0], [0], [1], [0, 0, 1, 1], [], []>} : vector<16x128xbf16>, vector<128x128xbf16>, vector<16x128xf32> -> vector<16x128xf32>
      %c0_8 = arith.constant 0 : index
      %c0_9 = arith.constant 0 : index
      %c0_10 = arith.constant 0 : index
      %19 = vector.load %arg8[%c0_8, %c0_9, %c0_10] : memref<1x128x128xbf16, #tpu.memory_space<vmem>>, vector<1x128x128xbf16>
      %20 = vector.shape_cast %19 : vector<1x128x128xbf16> to vector<128x128xbf16>
      %cst_11 = arith.constant dense<0.000000e+00> : vector<16x128xf32>
      %21 = tpu.matmul %15, %20, %cst_11 {dimension_numbers = #tpu.dot_dimension_numbers<[1], [0], [0], [1], [0, 0, 1, 1], [], []>} : vector<16x128xbf16>, vector<128x128xbf16>, vector<16x128xf32> -> vector<16x128xf32>
      %22 = arith.negf %18 : vector<16x128xf32>
      %23 = math.exp %22 : vector<16x128xf32>
      %cst_12 = arith.constant 1.000000e+00 : f32
      %24 = vector.broadcast %cst_12 : f32 to vector<16x128xf32>
      %25 = arith.addf %24, %23 : vector<16x128xf32>
      %26 = arith.divf %24, %25 : vector<16x128xf32>
      %27 = arith.mulf %18, %26 : vector<16x128xf32>
      %28 = arith.mulf %27, %21 : vector<16x128xf32>
      %29 = arith.truncf %28 : vector<16x128xf32> to vector<16x128xbf16>
      %c0_13 = arith.constant 0 : index
      %c0_14 = arith.constant 0 : index
      %c0_15 = arith.constant 0 : index
      %30 = vector.load %arg9[%c0_13, %c0_14, %c0_15] : memref<1x128x128xbf16, #tpu.memory_space<vmem>>, vector<1x128x128xbf16>
      %31 = vector.shape_cast %30 : vector<1x128x128xbf16> to vector<128x128xbf16>
      %cst_16 = arith.constant dense<0.000000e+00> : vector<16x128xf32>
      %32 = tpu.matmul %29, %31, %cst_16 {dimension_numbers = #tpu.dot_dimension_numbers<[1], [0], [0], [1], [0, 0, 1, 1], [], []>} : vector<16x128xbf16>, vector<128x128xbf16>, vector<16x128xf32> -> vector<16x128xf32>
      %c0_17 = arith.constant 0 : index
      %c0_18 = arith.constant 0 : index
      %33 = vector.load %arg5[%c0_17, %c0_18] : memref<16x2xi32, #tpu.memory_space<vmem>>, vector<16x2xi32>
      %34 = vector.broadcast %14 : i32 to vector<16x2xi32>
      %35 = arith.cmpi eq, %33, %34 : vector<16x2xi32>
      %36 = arith.extui %35 : vector<16x2xi1> to vector<16x2xi32>
      %37 = arith.sitofp %36 : vector<16x2xi32> to vector<16x2xf32>
      %c0_19 = arith.constant 0 : index
      %c0_20 = arith.constant 0 : index
      %38 = vector.load %arg6[%c0_19, %c0_20] : memref<16x2xf32, #tpu.memory_space<vmem>>, vector<16x2xf32>
      %39 = arith.mulf %38, %37 : vector<16x2xf32>
      %cst_21 = arith.constant dense<0.000000e+00> : vector<16xf32>
      %40 = vector.multi_reduction <add>, %39, %cst_21 [1] : vector<16x2xf32> to vector<16xf32>
      %41 = vector.shape_cast %40 : vector<16xf32> to vector<16x1xf32>
      %c0_22 = arith.constant 0 : index
      %c0_23 = arith.constant 0 : index
      %42 = vector.load %arg13[%c0_22, %c0_23] : memref<16x128xf32, #tpu.memory_space<vmem>>, vector<16x128xf32>
      %43 = vector.broadcast %41 : vector<16x1xf32> to vector<16x128xf32>
      %44 = arith.mulf %43, %32 : vector<16x128xf32>
      %45 = arith.addf %42, %44 : vector<16x128xf32>
      %c0_24 = arith.constant 0 : index
      %c0_25 = arith.constant 0 : index
      %46 = vector.load %arg13[%c0_24, %c0_25] : memref<16x128xf32, #tpu.memory_space<vmem>>, vector<16x128xf32>
      tpu.vector_store %arg13[%c0_24, %c0_25], %45 {strides = array<i32>} : memref<16x128xf32, #tpu.memory_space<vmem>>, vector<16x128xf32>,
    } else {
    }
    %c5_i32 = arith.constant 5 : i32
    %10 = arith.cmpi eq, %arg1, %c5_i32 : i32
    %11 = arith.extui %10 : i1 to i32
    %c0_i32_3 = arith.constant 0 : i32
    %12 = arith.cmpi ne, %11, %c0_i32_3 : i32
    scf.if %12 {
      %c0 = arith.constant 0 : index
      %c0_4 = arith.constant 0 : index
      %13 = vector.load %arg4[%c0, %c0_4] : memref<16x128xbf16, #tpu.memory_space<vmem>>, vector<16x128xbf16>
      %c0_5 = arith.constant 0 : index
      %c0_6 = arith.constant 0 : index
      %14 = vector.load %arg10[%c0_5, %c0_6] : memref<128x256xbf16, #tpu.memory_space<vmem>>, vector<128x256xbf16>
      %cst = arith.constant dense<0.000000e+00> : vector<16x256xf32>
      %15 = tpu.matmul %13, %14, %cst {dimension_numbers = #tpu.dot_dimension_numbers<[1], [0], [0], [1], [0, 0, 1, 1], [], []>} : vector<16x128xbf16>, vector<128x256xbf16>, vector<16x256xf32> -> vector<16x256xf32>
      %c0_7 = arith.constant 0 : index
      %c0_8 = arith.constant 0 : index
      %16 = vector.load %arg11[%c0_7, %c0_8] : memref<128x256xbf16, #tpu.memory_space<vmem>>, vector<128x256xbf16>
      %cst_9 = arith.constant dense<0.000000e+00> : vector<16x256xf32>
      %17 = tpu.matmul %13, %16, %cst_9 {dimension_numbers = #tpu.dot_dimension_numbers<[1], [0], [0], [1], [0, 0, 1, 1], [], []>} : vector<16x128xbf16>, vector<128x256xbf16>, vector<16x256xf32> -> vector<16x256xf32>
      %18 = arith.negf %15 : vector<16x256xf32>
      %19 = math.exp %18 : vector<16x256xf32>
      %cst_10 = arith.constant 1.000000e+00 : f32
      %20 = vector.broadcast %cst_10 : f32 to vector<16x256xf32>
      %21 = arith.addf %20, %19 : vector<16x256xf32>
      %22 = arith.divf %20, %21 : vector<16x256xf32>
      %23 = arith.mulf %15, %22 : vector<16x256xf32>
      %24 = arith.mulf %23, %17 : vector<16x256xf32>
      %c0_11 = arith.constant 0 : index
      %c0_12 = arith.constant 0 : index
      %25 = vector.load %arg13[%c0_11, %c0_12] : memref<16x128xf32, #tpu.memory_space<vmem>>, vector<16x128xf32>
      %26 = arith.truncf %24 : vector<16x256xf32> to vector<16x256xbf16>
      %c0_13 = arith.constant 0 : index
      %c0_14 = arith.constant 0 : index
      %27 = vector.load %arg12[%c0_13, %c0_14] : memref<256x128xbf16, #tpu.memory_space<vmem>>, vector<256x128xbf16>
      %cst_15 = arith.constant dense<0.000000e+00> : vector<16x128xf32>
      %28 = tpu.matmul %26, %27, %cst_15 {dimension_numbers = #tpu.dot_dimension_numbers<[1], [0], [0], [1], [0, 0, 1, 1], [], []>} : vector<16x256xbf16>, vector<256x128xbf16>, vector<16x128xf32> -> vector<16x128xf32>
      %29 = arith.addf %25, %28 : vector<16x128xf32>
      %c0_16 = arith.constant 0 : index
      %c0_17 = arith.constant 0 : index
      %30 = vector.load %arg13[%c0_16, %c0_17] : memref<16x128xf32, #tpu.memory_space<vmem>>, vector<16x128xf32>
      tpu.vector_store %arg13[%c0_16, %c0_17], %29 {strides = array<i32>} : memref<16x128xf32, #tpu.memory_space<vmem>>, vector<16x128xf32>,
    } else {
    }
    return
  }
  func.func @transform_0(%arg0: i32, %arg1: i32, %arg2: memref<6xi32, #tpu.memory_space<smem>>, %arg3: memref<6xi32, #tpu.memory_space<smem>>) -> (i32, i32) {
    %c0_i32 = arith.constant 0 : i32
    %c0_i32_0 = arith.constant 0 : i32
    return %arg0, %c0_i32 : i32, i32
  }
  func.func @transform_1(%arg0: i32, %arg1: i32, %arg2: memref<6xi32, #tpu.memory_space<smem>>, %arg3: memref<6xi32, #tpu.memory_space<smem>>) -> (i32, i32) {
    %c0_i32 = arith.constant 0 : i32
    %c0_i32_0 = arith.constant 0 : i32
    return %arg0, %c0_i32 : i32, i32
  }
  func.func @transform_2(%arg0: i32, %arg1: i32, %arg2: memref<6xi32, #tpu.memory_space<smem>>, %arg3: memref<6xi32, #tpu.memory_space<smem>>) -> (i32, i32) {
    %c0_i32 = arith.constant 0 : i32
    %c0_i32_0 = arith.constant 0 : i32
    return %arg0, %c0_i32 : i32, i32
  }
  func.func @transform_3(%arg0: i32, %arg1: i32, %arg2: memref<6xi32, #tpu.memory_space<smem>>, %arg3: memref<6xi32, #tpu.memory_space<smem>>) -> (i32, i32, i32) {
    %0 = arith.index_cast %arg1 : i32 to index
    %1 = memref.load %arg2[%0] : memref<6xi32, #tpu.memory_space<smem>>
    %c0_i32 = arith.constant 0 : i32
    %c0_i32_0 = arith.constant 0 : i32
    %c0_i32_1 = arith.constant 0 : i32
    return %1, %c0_i32, %c0_i32_0 : i32, i32, i32
  }
  func.func @transform_4(%arg0: i32, %arg1: i32, %arg2: memref<6xi32, #tpu.memory_space<smem>>, %arg3: memref<6xi32, #tpu.memory_space<smem>>) -> (i32, i32, i32) {
    %0 = arith.index_cast %arg1 : i32 to index
    %1 = memref.load %arg2[%0] : memref<6xi32, #tpu.memory_space<smem>>
    %c0_i32 = arith.constant 0 : i32
    %c0_i32_0 = arith.constant 0 : i32
    %c0_i32_1 = arith.constant 0 : i32
    return %1, %c0_i32, %c0_i32_0 : i32, i32, i32
  }
  func.func @transform_5(%arg0: i32, %arg1: i32, %arg2: memref<6xi32, #tpu.memory_space<smem>>, %arg3: memref<6xi32, #tpu.memory_space<smem>>) -> (i32, i32, i32) {
    %0 = arith.index_cast %arg1 : i32 to index
    %1 = memref.load %arg2[%0] : memref<6xi32, #tpu.memory_space<smem>>
    %c0_i32 = arith.constant 0 : i32
    %c0_i32_0 = arith.constant 0 : i32
    %c0_i32_1 = arith.constant 0 : i32
    return %1, %c0_i32, %c0_i32_0 : i32, i32, i32
  }
  func.func @transform_6(%arg0: i32, %arg1: i32, %arg2: memref<6xi32, #tpu.memory_space<smem>>, %arg3: memref<6xi32, #tpu.memory_space<smem>>) -> (i32, i32) {
    %c0_i32 = arith.constant 0 : i32
    %c0_i32_0 = arith.constant 0 : i32
    %c0_i32_1 = arith.constant 0 : i32
    return %c0_i32, %c0_i32_0 : i32, i32
  }
  func.func @transform_7(%arg0: i32, %arg1: i32, %arg2: memref<6xi32, #tpu.memory_space<smem>>, %arg3: memref<6xi32, #tpu.memory_space<smem>>) -> (i32, i32) {
    %c0_i32 = arith.constant 0 : i32
    %c0_i32_0 = arith.constant 0 : i32
    %c0_i32_1 = arith.constant 0 : i32
    return %c0_i32, %c0_i32_0 : i32, i32
  }
  func.func @transform_8(%arg0: i32, %arg1: i32, %arg2: memref<6xi32, #tpu.memory_space<smem>>, %arg3: memref<6xi32, #tpu.memory_space<smem>>) -> (i32, i32) {
    %c0_i32 = arith.constant 0 : i32
    %c0_i32_0 = arith.constant 0 : i32
    %c0_i32_1 = arith.constant 0 : i32
    return %c0_i32, %c0_i32_0 : i32, i32
  }
  func.func @transform_9(%arg0: i32, %arg1: i32, %arg2: memref<6xi32, #tpu.memory_space<smem>>, %arg3: memref<6xi32, #tpu.memory_space<smem>>) -> (i32, i32) {
    %c0_i32 = arith.constant 0 : i32
    %c0_i32_0 = arith.constant 0 : i32
    return %arg0, %c0_i32 : i32, i32
  }
}

</mosaic_0001>

<llo_original>
// kernel: moe_forward.1
$region0: #{moe_forward.1}
  #allocation0 [shape = 'u32[]', space=smem, size = 0x4, offset = 0x4, fixed_abs, tag = 'smem constant byte address 0x4 - core index']
  #allocation1 [shape = 'u32[144,128]{1,0:T(1,128)}', space=vmem, size = 0x12000, scoped, tag = 'internal scratch']
  #allocation2 [shape = 's32[1]{0}', space=sflag, size = 0x4, scoped, tag = 'scoped memory for moe_forward.1']
  #allocation3 [shape = 'u8[512]{0}', space=smem, size = 0x200, scoped, tag = 'prefetched SMEM operand 0']
  #allocation4 [shape = 'u8[512]{0}', space=smem, size = 0x200, scoped, tag = 'prefetched SMEM operand 1']
  %s0 = inlined_call_operand.vmem [shape: s32[6], index: 0, kind: input, shape index: {}]
  %s1 = inlined_call_operand.vmem [shape: s32[6], index: 1, kind: input, shape index: {}]
  %s2 = inlined_call_operand.vmem [shape: bf16[16,128], index: 2, kind: input, shape index: {}]
  %s3 = inlined_call_operand.vmem [shape: s32[16,2], index: 3, kind: input, shape index: {}]
  %s4 = inlined_call_operand.vmem [shape: f32[16,2], index: 4, kind: input, shape index: {}]
  %s5 = inlined_call_operand.vmem [shape: bf16[6,128,128], index: 5, kind: input, shape index: {}]
  %s6 = inlined_call_operand.vmem [shape: bf16[6,128,128], index: 6, kind: input, shape index: {}]
  %s7 = inlined_call_operand.vmem [shape: bf16[6,128,128], index: 7, kind: input, shape index: {}]
  %s8 = inlined_call_operand.vmem [shape: bf16[128,256], index: 8, kind: input, shape index: {}]
  %s9 = inlined_call_operand.vmem [shape: bf16[128,256], index: 9, kind: input, shape index: {}]
  %s10 = inlined_call_operand.vmem [shape: bf16[256,128], index: 10, kind: input, shape index: {}]
  %s11 = inlined_call_operand.hbm [shape: f32[16,128], index: 11, kind: output, shape index: {}]
  %s12 = sld [smem:[#allocation0]]
  $region81: #{moe_forward.1} parent=0
    _
  %s14 = ssub.s32 1, %s12
  %s15 = scalar_select 0, %s14, %s12
  %s16 = sshll.u32 %s0, 4
  %s17 = int_to_ptr.vmem [resolvable:$true] %s16
  %19 = dma.vmem_to_smem %s17, 16, [#allocation3], [#allocation2]
  %s20 = sshll.u32 %s1, 4
  %s21 = int_to_ptr.vmem [resolvable:$true] %s20
  %23 = dma.vmem_to_smem %s21, 16, [#allocation4], [#allocation2]
  %24 = dma.done [#allocation2], 32
  %25 = sfence
  $region1: #{moe_forward.1} parent=0
    #allocation5 [shape = 'u8[8192]{0}', space=vmem, size = 0x2000, scoped, tag = 'output window, operand 0, single buffered']
    #allocation6 [shape = 's32[2]{0}', space=sflag, size = 0x8, scoped, tag = 'scoped memory for moe_forward.1']
    %26 = vsyncpa [#allocation6], 0
    loop: start=0, step=1, limit=8
    $region2: #{moe_forward.1} parent=1 // loop_pre_header
      _
    $region3: #{moe_forward.1} parent=1 // loop_header
      %s28 = sphi 0, %s32
      %p29 = scmp.ge.s32.totalorder %s28, 8
      %s35 = sphi 0, %s47
      %s36 = sphi 0, %s43
      %s37 = sphi 0, %s35
      %s38 = sphi 0, %s36
      %s39 = sphi 0, %s37
      %s40 = sphi 0, %s38
      %s50 = sphi 0, %s52
      %s53 = sphi 0, %s50
      %s54 = sphi 0, %s53
      %s70 = sphi 0, %s54
      %s76 = sphi 0, %s78
      %s79 = sphi 0, %s76
      %s80 = sphi 0, %s79
      %s96 = sphi 0, %s80
      %s102 = sphi 0, %s104
      %s105 = sphi 0, %s102
      %s106 = sphi 0, %s105
      %s122 = sphi 0, %s106
      %s130 = sphi 0, %s132
      %s133 = sphi 0, %s130
      %s134 = sphi 0, %s133
      %s150 = sphi 0, %s134
      %s158 = sphi 0, %s160
      %s161 = sphi 0, %s158
      %s162 = sphi 0, %s161
      %s178 = sphi 0, %s162
      %s186 = sphi 0, %s188
      %s189 = sphi 0, %s186
      %s190 = sphi 0, %s189
      %s206 = sphi 0, %s190
      %s210 = sphi 0, %s210
      %s212 = sphi 0, %s210
      %s213 = sphi 0, %s212
      %s227 = sphi 0, %s213
      %s231 = sphi 0, %s231
      %s233 = sphi 0, %s231
      %s234 = sphi 0, %s233
      %s248 = sphi 0, %s234
      %s252 = sphi 0, %s252
      %s254 = sphi 0, %s252
      %s255 = sphi 0, %s254
      %s269 = sphi 0, %s255
      %s275 = sphi 0, %s277
      %s278 = sphi 0, %s275
      %s279 = sphi 0, %s278
      %s295 = sphi 0, %s279
    $region4: #{moe_forward.1} parent=1 // loop_header_branch
      %31 = sbr.rel (%p29) target = $region8
    $region5: #{moe_forward.1} parent=1 // loop_body
      %s33 = ssub.s32 %s28, 1
      %s34 = ssub.s32 %s28, 2
      %s41 = sadd.s32 1, %s36
      %p42 = scmp.ge.s32.totalorder %s41, 6
      %s43 = scalar_select %p42, 0, %s41
      %s44 = sadd.s32 1, %s35
      %s45 = scalar_select %p42, %s44, %s35
      %p46 = scmp.ge.s32.totalorder %s45, 1
      %s47 = scalar_select %p46, 0, %s45
      %s48 = ssub.s32 %s35, %s47
      %p49 = scmp.eq.s32.totalorder %s48, 0
      %s51 = sadd.s32 %s50, 1
      %s52 = scalar_select %p49, %s50, %s51
      %p55 = pneg %p49
      %p56 = scmp.eq.s32.totalorder %s28, 5
      %p57 = por %p55, %p56
      %p58 = scmp.ne.s32.totalorder %s50, %s53
      %p59 = scmp.eq.s32.totalorder %s28, 0
      %p60 = por %p58, %p59
      %p61 = scmp.ne.s32.totalorder %s50, %s53
      %p62 = scmp.eq.s32.totalorder %s33, 5
      %p63 = por %p61, %p62
      %p64 = scmp.ne.s32.totalorder %s53, %s54
      %p65 = scmp.eq.s32.totalorder %s33, 0
      %p66 = por %p64, %p65
      %p67 = scmp.ne.s32.totalorder %s53, %s54
      %p68 = scmp.eq.s32.totalorder %s34, 5
      %p69 = por %p67, %p68
      %p71 = scmp.ne.s32.totalorder %s54, %s70
      %p72 = scmp.eq.s32.totalorder %s34, 0
      %p73 = por %p71, %p72
      %s74 = ssub.s32 %s35, %s47
      %p75 = scmp.eq.s32.totalorder %s74, 0
      %s77 = sadd.s32 %s76, 1
      %s78 = scalar_select %p75, %s76, %s77
      %p81 = pneg %p75
      %p82 = scmp.eq.s32.totalorder %s28, 5
      %p83 = por %p81, %p82
      %p84 = scmp.ne.s32.totalorder %s76, %s79
      %p85 = scmp.eq.s32.totalorder %s28, 0
      %p86 = por %p84, %p85
      %p87 = scmp.ne.s32.totalorder %s76, %s79
      %p88 = scmp.eq.s32.totalorder %s33, 5
      %p89 = por %p87, %p88
      %p90 = scmp.ne.s32.totalorder %s79, %s80
      %p91 = scmp.eq.s32.totalorder %s33, 0
      %p92 = por %p90, %p91
      %p93 = scmp.ne.s32.totalorder %s79, %s80
      %p94 = scmp.eq.s32.totalorder %s34, 5
      %p95 = por %p93, %p94
      %p97 = scmp.ne.s32.totalorder %s80, %s96
      %p98 = scmp.eq.s32.totalorder %s34, 0
      %p99 = por %p97, %p98
      %s100 = ssub.s32 %s35, %s47
      %p101 = scmp.eq.s32.totalorder %s100, 0
      %s103 = sadd.s32 %s102, 1
      %s104 = scalar_select %p101, %s102, %s103
      %p107 = pneg %p101
      %p108 = scmp.eq.s32.totalorder %s28, 5
      %p109 = por %p107, %p108
      %p110 = scmp.ne.s32.totalorder %s102, %s105
      %p111 = scmp.eq.s32.totalorder %s28, 0
      %p112 = por %p110, %p111
      %p113 = scmp.ne.s32.totalorder %s102, %s105
      %p114 = scmp.eq.s32.totalorder %s33, 5
      %p115 = por %p113, %p114
      %p116 = scmp.ne.s32.totalorder %s105, %s106
      %p117 = scmp.eq.s32.totalorder %s33, 0
      %p118 = por %p116, %p117
      %p119 = scmp.ne.s32.totalorder %s105, %s106
      %p120 = scmp.eq.s32.totalorder %s34, 5
      %p121 = por %p119, %p120
      %p123 = scmp.ne.s32.totalorder %s106, %s122
      %p124 = scmp.eq.s32.totalorder %s34, 0
      %p125 = por %p123, %p124
      %s126 = sld [smem:[#allocation3 + %s36]]
      %s127 = sld [smem:[#allocation3 + %s43]]
      %s128 = ssub.s32 %s126, %s127
      %p129 = scmp.eq.s32.totalorder %s128, 0
      %s131 = sadd.s32 %s130, 1
      %s132 = scalar_select %p129, %s130, %s131
      %p135 = pneg %p129
      %p136 = scmp.eq.s32.totalorder %s28, 5
      %p137 = por %p135, %p136
      %p138 = scmp.ne.s32.totalorder %s130, %s133
      %p139 = scmp.eq.s32.totalorder %s28, 0
      %p140 = por %p138, %p139
      %p141 = scmp.ne.s32.totalorder %s130, %s133
      %p142 = scmp.eq.s32.totalorder %s33, 5
      %p143 = por %p141, %p142
      %p144 = scmp.ne.s32.totalorder %s133, %s134
      %p145 = scmp.eq.s32.totalorder %s33, 0
      %p146 = por %p144, %p145
      %p147 = scmp.ne.s32.totalorder %s133, %s134
      %p148 = scmp.eq.s32.totalorder %s34, 5
      %p149 = por %p147, %p148
      %p151 = scmp.ne.s32.totalorder %s134, %s150
      %p152 = scmp.eq.s32.totalorder %s34, 0
      %p153 = por %p151, %p152
      %s154 = sld [smem:[#allocation3 + %s36]]
      %s155 = sld [smem:[#allocation3 + %s43]]
      %s156 = ssub.s32 %s154, %s155
      %p157 = scmp.eq.s32.totalorder %s156, 0
      %s159 = sadd.s32 %s158, 1
      %s160 = scalar_select %p157, %s158, %s159
      %p163 = pneg %p157
      %p164 = scmp.eq.s32.totalorder %s28, 5
      %p165 = por %p163, %p164
      %p166 = scmp.ne.s32.totalorder %s158, %s161
      %p167 = scmp.eq.s32.totalorder %s28, 0
      %p168 = por %p166, %p167
      %p169 = scmp.ne.s32.totalorder %s158, %s161
      %p170 = scmp.eq.s32.totalorder %s33, 5
      %p171 = por %p169, %p170
      %p172 = scmp.ne.s32.totalorder %s161, %s162
      %p173 = scmp.eq.s32.totalorder %s33, 0
      %p174 = por %p172, %p173
      %p175 = scmp.ne.s32.totalorder %s161, %s162
      %p176 = scmp.eq.s32.totalorder %s34, 5
      %p177 = por %p175, %p176
      %p179 = scmp.ne.s32.totalorder %s162, %s178
      %p180 = scmp.eq.s32.totalorder %s34, 0
      %p181 = por %p179, %p180
      %s182 = sld [smem:[#allocation3 + %s36]]
      %s183 = sld [smem:[#allocation3 + %s43]]
      %s184 = ssub.s32 %s182, %s183
      %p185 = scmp.eq.s32.totalorder %s184, 0
      %s187 = sadd.s32 %s186, 1
      %s188 = scalar_select %p185, %s186, %s187
      %p191 = pneg %p185
      %p192 = scmp.eq.s32.totalorder %s28, 5
      %p193 = por %p191, %p192
      %p194 = scmp.ne.s32.totalorder %s186, %s189
      %p195 = scmp.eq.s32.totalorder %s28, 0
      %p196 = por %p194, %p195
      %p197 = scmp.ne.s32.totalorder %s186, %s189
      %p198 = scmp.eq.s32.totalorder %s33, 5
      %p199 = por %p197, %p198
      %p200 = scmp.ne.s32.totalorder %s189, %s190
      %p201 = scmp.eq.s32.totalorder %s33, 0
      %p202 = por %p200, %p201
      %p203 = scmp.ne.s32.totalorder %s189, %s190
      %p204 = scmp.eq.s32.totalorder %s34, 5
      %p205 = por %p203, %p204
      %p207 = scmp.ne.s32.totalorder %s190, %s206
      %p208 = scmp.eq.s32.totalorder %s34, 0
      %p209 = por %p207, %p208
      %s211 = sadd.s32 %s210, 1
      %p214 = scmp.eq.s32.totalorder %s28, 5
      %p215 = scmp.ne.s32.totalorder %s210, %s212
      %p216 = scmp.eq.s32.totalorder %s28, 0
      %p217 = por %p215, %p216
      %p218 = scmp.ne.s32.totalorder %s210, %s212
      %p219 = scmp.eq.s32.totalorder %s33, 5
      %p220 = por %p218, %p219
      %p221 = scmp.ne.s32.totalorder %s212, %s213
      %p222 = scmp.eq.s32.totalorder %s33, 0
      %p223 = por %p221, %p222
      %p224 = scmp.ne.s32.totalorder %s212, %s213
      %p225 = scmp.eq.s32.totalorder %s34, 5
      %p226 = por %p224, %p225
      %p228 = scmp.ne.s32.totalorder %s213, %s227
      %p229 = scmp.eq.s32.totalorder %s34, 0
      %p230 = por %p228, %p229
      %s232 = sadd.s32 %s231, 1
      %p235 = scmp.eq.s32.totalorder %s28, 5
      %p236 = scmp.ne.s32.totalorder %s231, %s233
      %p237 = scmp.eq.s32.totalorder %s28, 0
      %p238 = por %p236, %p237
      %p239 = scmp.ne.s32.totalorder %s231, %s233
      %p240 = scmp.eq.s32.totalorder %s33, 5
      %p241 = por %p239, %p240
      %p242 = scmp.ne.s32.totalorder %s233, %s234
      %p243 = scmp.eq.s32.totalorder %s33, 0
      %p244 = por %p242, %p243
      %p245 = scmp.ne.s32.totalorder %s233, %s234
      %p246 = scmp.eq.s32.totalorder %s34, 5
      %p247 = por %p245, %p246
      %p249 = scmp.ne.s32.totalorder %s234, %s248
      %p250 = scmp.eq.s32.totalorder %s34, 0
      %p251 = por %p249, %p250
      %s253 = sadd.s32 %s252, 1
      %p256 = scmp.eq.s32.totalorder %s28, 5
      %p257 = scmp.ne.s32.totalorder %s252, %s254
      %p258 = scmp.eq.s32.totalorder %s28, 0
      %p259 = por %p257, %p258
      %p260 = scmp.ne.s32.totalorder %s252, %s254
      %p261 = scmp.eq.s32.totalorder %s33, 5
      %p262 = por %p260, %p261
      %p263 = scmp.ne.s32.totalorder %s254, %s255
      %p264 = scmp.eq.s32.totalorder %s33, 0
      %p265 = por %p263, %p264
      %p266 = scmp.ne.s32.totalorder %s254, %s255
      %p267 = scmp.eq.s32.totalorder %s34, 5
      %p268 = por %p266, %p267
      %p270 = scmp.ne.s32.totalorder %s255, %s269
      %p271 = scmp.eq.s32.totalorder %s34, 0
      %p272 = por %p270, %p271
      %s273 = ssub.s32 %s35, %s47
      %p274 = scmp.eq.s32.totalorder %s273, 0
      %s276 = sadd.s32 %s275, 1
      %s277 = scalar_select %p274, %s275, %s276
      %p280 = pneg %p274
      %p281 = scmp.eq.s32.totalorder %s28, 5
      %p282 = por %p280, %p281
      %p283 = scmp.ne.s32.totalorder %s275, %s278
      %p284 = scmp.eq.s32.totalorder %s28, 0
      %p285 = por %p283, %p284
      %p286 = scmp.ne.s32.totalorder %s275, %s278
      %p287 = scmp.eq.s32.totalorder %s33, 5
      %p288 = por %p286, %p287
      %p289 = scmp.ne.s32.totalorder %s278, %s279
      %p290 = scmp.eq.s32.totalorder %s33, 0
      %p291 = por %p289, %p290
      %p292 = scmp.ne.s32.totalorder %s278, %s279
      %p293 = scmp.eq.s32.totalorder %s34, 5
      %p294 = por %p292, %p293
      %p296 = scmp.ne.s32.totalorder %s279, %s295
      %p297 = scmp.eq.s32.totalorder %s34, 0
      %p298 = por %p296, %p297
      %p299 = scmp.le.s32.totalorder 1, %s28
      %p300 = scmp.lt.s32.totalorder %s28, 7
      %p301 = pnand %p299, %p300
      %p302 = pneg %p301
      // Predicated region
      $region9: #{moe_forward.1} parent=5 // pred_check
        _
      $region10: #{moe_forward.1} parent=5 // pred_check_branch
        %304 = sbr.rel (%p301) target = $region12
      $region11: #{moe_forward.1} parent=5 // pred_region
        %s305 = ssub.s32 %s28, 1
        // Predicated region
        $region13: #{moe_forward.1} parent=11 // pred_check
          %p306 = pneg %p66
        $region14: #{moe_forward.1} parent=11 // pred_check_branch
          %308 = sbr.rel (%p306) target = $region16
        $region15: #{moe_forward.1} parent=11 // pred_region
          %s309 = smul.u32 2, %s37
          %p310 = scmp.lt.s32.totalorder %s309, 1
          %s311 = scalar_select %p310, %s309, 1
          %s312 = smul.addr %s311, 4
          %s313 = scalar_lea.vmem %s2, %s312
          %s314 = smul.u32 2, %s37
        $region16: #{moe_forward.1} parent=11 // pred_fallthru
          _
        // Predicated region
        $region17: #{moe_forward.1} parent=11 // pred_check
          %p315 = pneg %p92
        $region18: #{moe_forward.1} parent=11 // pred_check_branch
          %317 = sbr.rel (%p315) target = $region20
        $region19: #{moe_forward.1} parent=11 // pred_region
          %s318 = smul.u32 2, %s37
          %p319 = scmp.lt.s32.totalorder %s318, 1
          %s320 = scalar_select %p319, %s318, 1
          %s321 = smul.addr %s320, 8
          %s322 = scalar_lea.vmem %s3, %s321
          %s323 = smul.u32 2, %s37
        $region20: #{moe_forward.1} parent=11 // pred_fallthru
          _
        // Predicated region
        $region21: #{moe_forward.1} parent=11 // pred_check
          %p324 = pneg %p118
        $region22: #{moe_forward.1} parent=11 // pred_check_branch
          %326 = sbr.rel (%p324) target = $region24
        $region23: #{moe_forward.1} parent=11 // pred_region
          %s327 = smul.u32 2, %s37
          %p328 = scmp.lt.s32.totalorder %s327, 1
          %s329 = scalar_select %p328, %s327, 1
          %s330 = smul.addr %s329, 8
          %s331 = scalar_lea.vmem %s4, %s330
          %s332 = smul.u32 2, %s37
        $region24: #{moe_forward.1} parent=11 // pred_fallthru
          _
        // Predicated region
        $region25: #{moe_forward.1} parent=11 // pred_check
          %p333 = pneg %p223
        $region26: #{moe_forward.1} parent=11 // pred_check_branch
          %335 = sbr.rel (%p333) target = $region28
        $region27: #{moe_forward.1} parent=11 // pred_region
          _
        $region28: #{moe_forward.1} parent=11 // pred_fallthru
          _
        // Predicated region
        $region29: #{moe_forward.1} parent=11 // pred_check
          %p336 = pneg %p244
        $region30: #{moe_forward.1} parent=11 // pred_check_branch
          %338 = sbr.rel (%p336) target = $region32
        $region31: #{moe_forward.1} parent=11 // pred_region
          _
        $region32: #{moe_forward.1} parent=11 // pred_fallthru
          _
        // Predicated region
        $region33: #{moe_forward.1} parent=11 // pred_check
          %p339 = pneg %p265
        $region34: #{moe_forward.1} parent=11 // pred_check_branch
          %341 = sbr.rel (%p339) target = $region36
        $region35: #{moe_forward.1} parent=11 // pred_region
          _
        $region36: #{moe_forward.1} parent=11 // pred_fallthru
          _
      $region12: #{moe_forward.1} parent=5 // pred_fallthru
        _
      %p342 = scmp.lt.s32.totalorder %s28, 6
      // Predicated region
      $region37: #{moe_forward.1} parent=5 // pred_check
        %p343 = pneg %p342
      $region38: #{moe_forward.1} parent=5 // pred_check_branch
        %345 = sbr.rel (%p343) target = $region40
      $region39: #{moe_forward.1} parent=5 // pred_region
        // Predicated region
        $region41: #{moe_forward.1} parent=39 // pred_check
          %p346 = pneg %p140
        $region42: #{moe_forward.1} parent=39 // pred_check_branch
          %348 = sbr.rel (%p346) target = $region44
        $region43: #{moe_forward.1} parent=39 // pred_region
          %s349 = sld [smem:[#allocation3 + %s36]]
          %p350 = scmp.lt.s32.totalorder %s349, 5
          %s351 = scalar_select %p350, %s349, 5
          %s352 = smul.addr %s351, 16
          %s353 = smul.addr %s352, 4
          %s354 = scalar_lea.vmem %s5, %s353
          %s355 = sld [smem:[#allocation3 + %s36]]
        $region44: #{moe_forward.1} parent=39 // pred_fallthru
          _
        // Predicated region
        $region45: #{moe_forward.1} parent=39 // pred_check
          %p356 = pneg %p168
        $region46: #{moe_forward.1} parent=39 // pred_check_branch
          %358 = sbr.rel (%p356) target = $region48
        $region47: #{moe_forward.1} parent=39 // pred_region
          %s359 = sld [smem:[#allocation3 + %s36]]
          %p360 = scmp.lt.s32.totalorder %s359, 5
          %s361 = scalar_select %p360, %s359, 5
          %s362 = smul.addr %s361, 16
          %s363 = smul.addr %s362, 4
          %s364 = scalar_lea.vmem %s6, %s363
          %s365 = sld [smem:[#allocation3 + %s36]]
        $region48: #{moe_forward.1} parent=39 // pred_fallthru
          _
        // Predicated region
        $region49: #{moe_forward.1} parent=39 // pred_check
          %p366 = pneg %p196
        $region50: #{moe_forward.1} parent=39 // pred_check_branch
          %368 = sbr.rel (%p366) target = $region52
        $region51: #{moe_forward.1} parent=39 // pred_region
          %s369 = sld [smem:[#allocation3 + %s36]]
          %p370 = scmp.lt.s32.totalorder %s369, 5
          %s371 = scalar_select %p370, %s369, 5
          %s372 = smul.addr %s371, 16
          %s373 = smul.addr %s372, 4
          %s374 = scalar_lea.vmem %s7, %s373
          %s375 = sld [smem:[#allocation3 + %s36]]
        $region52: #{moe_forward.1} parent=39 // pred_fallthru
          _
      $region40: #{moe_forward.1} parent=5 // pred_fallthru
        _
      %p376 = scmp.le.s32.totalorder 1, %s28
      %p377 = scmp.lt.s32.totalorder %s28, 7
      %p378 = pnand %p376, %p377
      %p379 = pneg %p378
      // Predicated region
      $region53: #{moe_forward.1} parent=5 // pred_check
        _
      $region54: #{moe_forward.1} parent=5 // pred_check_branch
        %381 = sbr.rel (%p378) target = $region56
      $region55: #{moe_forward.1} parent=5 // pred_region
        %s382 = ssub.s32 %s28, 1
        %s383 = smul.u32 2, %s37
        %p384 = scmp.lt.s32.totalorder %s383, 1
        %s385 = scalar_select %p384, %s383, 1
        %s386 = smul.addr %s385, 4
        %s387 = scalar_lea.vmem %s2, %s386
        %p388 = pneg %p66
        %p389 = pneg %p63
        %s390 = smul.u32 2, %s37
        %p391 = scmp.lt.s32.totalorder %s390, 1
        %s392 = scalar_select %p391, %s390, 1
        %s393 = smul.addr %s392, 8
        %s394 = scalar_lea.vmem %s3, %s393
        %p395 = pneg %p92
        %p396 = pneg %p89
        %s397 = smul.u32 2, %s37
        %p398 = scmp.lt.s32.totalorder %s397, 1
        %s399 = scalar_select %p398, %s397, 1
        %s400 = smul.addr %s399, 8
        %s401 = scalar_lea.vmem %s4, %s400
        %p402 = pneg %p118
        %p403 = pneg %p115
        %s404 = sld [smem:[#allocation3 + %s38]]
        %p405 = scmp.lt.s32.totalorder %s404, 5
        %s406 = scalar_select %p405, %s404, 5
        %s407 = smul.addr %s406, 16
        %s408 = smul.addr %s407, 4
        %s409 = scalar_lea.vmem %s5, %s408
        %p410 = pneg %p146
        %p411 = pneg %p143
        %s412 = sld [smem:[#allocation3 + %s38]]
        %p413 = scmp.lt.s32.totalorder %s412, 5
        %s414 = scalar_select %p413, %s412, 5
        %s415 = smul.addr %s414, 16
        %s416 = smul.addr %s415, 4
        %s417 = scalar_lea.vmem %s6, %s416
        %p418 = pneg %p174
        %p419 = pneg %p171
        %s420 = sld [smem:[#allocation3 + %s38]]
        %p421 = scmp.lt.s32.totalorder %s420, 5
        %s422 = scalar_select %p421, %s420, 5
        %s423 = smul.addr %s422, 16
        %s424 = smul.addr %s423, 4
        %s425 = scalar_lea.vmem %s7, %s424
        %p426 = pneg %p202
        %p427 = pneg %p199
        %p428 = pneg %p223
        %p429 = pneg %p220
        %p430 = pneg %p244
        %p431 = pneg %p241
        %p432 = pneg %p265
        %p433 = pneg %p262
        %p434 = pneg %p291
        %p435 = pneg %p288
        %s436 = smul.u32 2, %s37
        %p437 = scmp.lt.s32.totalorder %s436, 1
        %s438 = scalar_select %p437, %s436, 1
        %s439 = smul.addr %s438, 4
        %s440 = scalar_lea.vmem %s2, %s439
        %s441 = smul.u32 2, %s37
        %s442 = smul.u32 2, %s37
        %p443 = scmp.lt.s32.totalorder %s442, 1
        %s444 = scalar_select %p443, %s442, 1
        %s445 = smul.addr %s444, 8
        %s446 = scalar_lea.vmem %s3, %s445
        %s447 = smul.u32 2, %s37
        %s448 = smul.u32 2, %s37
        %p449 = scmp.lt.s32.totalorder %s448, 1
        %s450 = scalar_select %p449, %s448, 1
        %s451 = smul.addr %s450, 8
        %s452 = scalar_lea.vmem %s4, %s451
        %s453 = smul.u32 2, %s37
        %s454 = sld [smem:[#allocation3 + %s38]]
        %p455 = scmp.lt.s32.totalorder %s454, 5
        %s456 = scalar_select %p455, %s454, 5
        %s457 = smul.addr %s456, 16
        %s458 = smul.addr %s457, 4
        %s459 = scalar_lea.vmem %s5, %s458
        %s460 = sld [smem:[#allocation3 + %s38]]
        %s461 = sld [smem:[#allocation3 + %s38]]
        %p462 = scmp.lt.s32.totalorder %s461, 5
        %s463 = scalar_select %p462, %s461, 5
        %s464 = smul.addr %s463, 16
        %s465 = smul.addr %s464, 4
        %s466 = scalar_lea.vmem %s6, %s465
        %s467 = sld [smem:[#allocation3 + %s38]]
        %s468 = sld [smem:[#allocation3 + %s38]]
        %p469 = scmp.lt.s32.totalorder %s468, 5
        %s470 = scalar_select %p469, %s468, 5
        %s471 = smul.addr %s470, 16
        %s472 = smul.addr %s471, 4
        %s473 = scalar_lea.vmem %s7, %s472
        %s474 = sld [smem:[#allocation3 + %s38]]
        %s475 = smul.u32 2, %s37
        %p477 = scmp.eq.s32.totalorder %s38, 0
        // Predicated region
        $region57: #{moe_forward.1} parent=55 // pred_check
          %p478 = pneg %p477
        $region58: #{moe_forward.1} parent=55 // pred_check_branch
          %480 = sbr.rel (%p478) target = $region60
        $region59: #{moe_forward.1} parent=55 // pred_region
          %481 = vst [vmem:[#allocation5] sm:$0xff] 0.0
          %482 = vst [vmem:[#allocation5 + $0x8] sm:$0xff] 0.0
        $region60: #{moe_forward.1} parent=55 // pred_fallthru
          _
        %s483 = smul.u32 %s37, 6
        %s484 = sadd.s32 %s483, %s38
        %s485 = sld [smem:[#allocation4 + %s484]]
        %p486 = scmp.gt.s32.totalorder %s485, 0
        // Predicated region
        $region61: #{moe_forward.1} parent=55 // pred_check
          %p487 = pneg %p486
        $region62: #{moe_forward.1} parent=55 // pred_check_branch
          %489 = sbr.rel (%p487) target = $region64
        $region63: #{moe_forward.1} parent=55 // pred_region
          %s490 = sld [smem:[#allocation3 + %s38]]
          %v491 = vld [vmem:[%s440] sm:$0xf]
          %v492 = vld [vmem:[%s440 + $0x4] sm:$0xf]
          %v493 = vld [vmem:[%s459] sm:$0xf]
          %v494 = vld [vmem:[%s459 + $0x4] sm:$0xf]
          %v495 = vld [vmem:[%s459 + $0x8] sm:$0xf]
          %v496 = vld [vmem:[%s459 + $0xc] sm:$0xf]
          %v497 = vld [vmem:[%s459 + $0x10] sm:$0xf]
          %v498 = vld [vmem:[%s459 + $0x14] sm:$0xf]
          %v499 = vld [vmem:[%s459 + $0x18] sm:$0xf]
          %v500 = vld [vmem:[%s459 + $0x1c] sm:$0xf]
          %v501 = vld [vmem:[%s459 + $0x20] sm:$0xf]
          %v502 = vld [vmem:[%s459 + $0x24] sm:$0xf]
          %v503 = vld [vmem:[%s459 + $0x28] sm:$0xf]
          %v504 = vld [vmem:[%s459 + $0x2c] sm:$0xf]
          %v505 = vld [vmem:[%s459 + $0x30] sm:$0xf]
          %v506 = vld [vmem:[%s459 + $0x34] sm:$0xf]
          %v507 = vld [vmem:[%s459 + $0x38] sm:$0xf]
          %v508 = vld [vmem:[%s459 + $0x3c] sm:$0xf]
          %v511 = vunpack.c.l.b16 %v491
          %v512 = vunpack.c.l.b16 %v492
          %v513 = vpack.c.b16 %v512, %v511
          %v531 = vunpack.c.l.b16 %v493
          %v532 = vunpack.c.l.b16 %v494
          %v533 = vunpack.c.l.b16 %v495
          %v534 = vunpack.c.l.b16 %v496
          %v535 = vunpack.c.l.b16 %v497
          %v536 = vunpack.c.l.b16 %v498
          %v537 = vunpack.c.l.b16 %v499
          %v538 = vunpack.c.l.b16 %v500
          %v539 = vunpack.c.l.b16 %v501
          %v540 = vunpack.c.l.b16 %v502
          %v541 = vunpack.c.l.b16 %v503
          %v542 = vunpack.c.l.b16 %v504
          %v543 = vunpack.c.l.b16 %v505
          %v544 = vunpack.c.l.b16 %v506
          %v545 = vunpack.c.l.b16 %v507
          %v546 = vunpack.c.l.b16 %v508
          %v547 = vpack.c.b16 %v532, %v531
          %v548 = vpack.c.b16 %v534, %v533
          %v549 = vpack.c.b16 %v536, %v535
          %v550 = vpack.c.b16 %v538, %v537
          %v551 = vpack.c.b16 %v540, %v539
          %v552 = vpack.c.b16 %v542, %v541
          %v553 = vpack.c.b16 %v544, %v543
          %v554 = vpack.c.b16 %v546, %v545
          %563 = vmatprep.subr.bf16.mxu0 0
          %564 = vmatpush1.bf16.msra.mxu0 %v547
          %565 = vmatprep.subr.bf16.mxu0 0
          %566 = vmatpush1.bf16.msra.mxu0 %v548
          %567 = vmatprep.subr.bf16.mxu0 0
          %568 = vmatpush1.bf16.msra.mxu0 %v549
          %569 = vmatprep.subr.bf16.mxu0 0
          %570 = vmatpush1.bf16.msra.mxu0 %v550
          %571 = vmatprep.subr.bf16.mxu0 0
          %572 = vmatpush1.bf16.msra.mxu0 %v551
          %573 = vmatprep.subr.bf16.mxu0 0
          %574 = vmatpush1.bf16.msra.mxu0 %v552
          %575 = vmatprep.subr.bf16.mxu0 0
          %576 = vmatpush1.bf16.msra.mxu0 %v553
          %577 = vmatprep.subr.bf16.mxu0 0
          %578 = vmatpush1.bf16.msra.mxu0 %v554
          %579 = vmatprep.subr.bf16.mxu0 0
          %580 = vmatpush1.bf16.msra.mxu0 0
          %581 = vmatprep.subr.bf16.mxu0 0
          %582 = vmatpush1.bf16.msra.mxu0 0
          %583 = vmatprep.subr.bf16.mxu0 0
          %584 = vmatpush1.bf16.msra.mxu0 0
          %585 = vmatprep.subr.bf16.mxu0 0
          %586 = vmatpush1.bf16.msra.mxu0 0
          %587 = vmatprep.subr.bf16.mxu0 0
          %588 = vmatpush1.bf16.msra.mxu0 0
          %589 = vmatprep.subr.bf16.mxu0 0
          %590 = vmatpush1.bf16.msra.mxu0 0
          %591 = vmatprep.subr.bf16.mxu0 0
          %592 = vmatpush1.bf16.msra.mxu0 0
          %593 = vmatprep.subr.bf16.mxu0 0
          %594 = vmatpush1.bf16.msra.mxu0 0
          %595 = vmatprep.mubr.bf16.mxu0 0
          %596 = vmatmul.mubr.bf16.gmra.mrb[0].mxu0 %v513
          %v597 = vpop.f32.mrb[0].mxu0
          %v598 = vadd.f32 0.0, %v597
          %v599 = vpop.f32.mrb[0].mxu0
          %v600 = vpop.f32.mrb[0].mxu0
          %v601 = vadd.f32 0.0, %v600
          %v602 = vpop.f32.mrb[0].mxu0
          %603 = vdwg.mxu0
          %v604 = vld [vmem:[%s466] sm:$0xf]
          %v605 = vld [vmem:[%s466 + $0x4] sm:$0xf]
          %v606 = vld [vmem:[%s466 + $0x8] sm:$0xf]
          %v607 = vld [vmem:[%s466 + $0xc] sm:$0xf]
          %v608 = vld [vmem:[%s466 + $0x10] sm:$0xf]
          %v609 = vld [vmem:[%s466 + $0x14] sm:$0xf]
          %v610 = vld [vmem:[%s466 + $0x18] sm:$0xf]
          %v611 = vld [vmem:[%s466 + $0x1c] sm:$0xf]
          %v612 = vld [vmem:[%s466 + $0x20] sm:$0xf]
          %v613 = vld [vmem:[%s466 + $0x24] sm:$0xf]
          %v614 = vld [vmem:[%s466 + $0x28] sm:$0xf]
          %v615 = vld [vmem:[%s466 + $0x2c] sm:$0xf]
          %v616 = vld [vmem:[%s466 + $0x30] sm:$0xf]
          %v617 = vld [vmem:[%s466 + $0x34] sm:$0xf]
          %v618 = vld [vmem:[%s466 + $0x38] sm:$0xf]
          %v619 = vld [vmem:[%s466 + $0x3c] sm:$0xf]
          %v636 = vunpack.c.l.b16 %v604
          %v637 = vunpack.c.l.b16 %v605
          %v638 = vunpack.c.l.b16 %v606
          %v639 = vunpack.c.l.b16 %v607
          %v640 = vunpack.c.l.b16 %v608
          %v641 = vunpack.c.l.b16 %v609
          %v642 = vunpack.c.l.b16 %v610
          %v643 = vunpack.c.l.b16 %v611
          %v644 = vunpack.c.l.b16 %v612
          %v645 = vunpack.c.l.b16 %v613
          %v646 = vunpack.c.l.b16 %v614
          %v647 = vunpack.c.l.b16 %v615
          %v648 = vunpack.c.l.b16 %v616
          %v649 = vunpack.c.l.b16 %v617
          %v650 = vunpack.c.l.b16 %v618
          %v651 = vunpack.c.l.b16 %v619
          %v652 = vpack.c.b16 %v637, %v636
          %v653 = vpack.c.b16 %v639, %v638
          %v654 = vpack.c.b16 %v641, %v640
          %v655 = vpack.c.b16 %v643, %v642
          %v656 = vpack.c.b16 %v645, %v644
          %v657 = vpack.c.b16 %v647, %v646
          %v658 = vpack.c.b16 %v649, %v648
          %v659 = vpack.c.b16 %v651, %v650
          %668 = vmatprep.subr.bf16.mxu0 0
          %669 = vmatpush1.bf16.msra.mxu0 %v652
          %670 = vmatprep.subr.bf16.mxu0 0
          %671 = vmatpush1.bf16.msra.mxu0 %v653
          %672 = vmatprep.subr.bf16.mxu0 0
          %673 = vmatpush1.bf16.msra.mxu0 %v654
          %674 = vmatprep.subr.bf16.mxu0 0
          %675 = vmatpush1.bf16.msra.mxu0 %v655
          %676 = vmatprep.subr.bf16.mxu0 0
          %677 = vmatpush1.bf16.msra.mxu0 %v656
          %678 = vmatprep.subr.bf16.mxu0 0
          %679 = vmatpush1.bf16.msra.mxu0 %v657
          %680 = vmatprep.subr.bf16.mxu0 0
          %681 = vmatpush1.bf16.msra.mxu0 %v658
          %682 = vmatprep.subr.bf16.mxu0 0
          %683 = vmatpush1.bf16.msra.mxu0 %v659
          %684 = vmatprep.subr.bf16.mxu0 0
          %685 = vmatpush1.bf16.msra.mxu0 0
          %686 = vmatprep.subr.bf16.mxu0 0
          %687 = vmatpush1.bf16.msra.mxu0 0
          %688 = vmatprep.subr.bf16.mxu0 0
          %689 = vmatpush1.bf16.msra.mxu0 0
          %690 = vmatprep.subr.bf16.mxu0 0
          %691 = vmatpush1.bf16.msra.mxu0 0
          %692 = vmatprep.subr.bf16.mxu0 0
          %693 = vmatpush1.bf16.msra.mxu0 0
          %694 = vmatprep.subr.bf16.mxu0 0
          %695 = vmatpush1.bf16.msra.mxu0 0
          %696 = vmatprep.subr.bf16.mxu0 0
          %697 = vmatpush1.bf16.msra.mxu0 0
          %698 = vmatprep.subr.bf16.mxu0 0
          %699 = vmatpush1.bf16.msra.mxu0 0
          %700 = vmatprep.mubr.bf16.mxu0 0
          %701 = vmatmul.mubr.bf16.gmra.mrb[0].mxu0 %v513
          %v702 = vpop.f32.mrb[0].mxu0
          %v703 = vadd.f32 0.0, %v702
          %v704 = vpop.f32.mrb[0].mxu0
          %v705 = vpop.f32.mrb[0].mxu0
          %v706 = vadd.f32 0.0, %v705
          %v707 = vpop.f32.mrb[0].mxu0
          %708 = vdwg.mxu0
          %v709 = vxor.u32 %v598, 2147483648
          %v710 = vxor.u32 %v601, 2147483648
          %v711 = vmul.f32 %v709, 1.442695
          %v712 = vpow.pop %v711
          %v713 = vmul.f32 %v710, 1.442695
          %v714 = vpow.pop %v713
          %v715 = vadd.f32 %v712, 1.0
          %v716 = vadd.f32 %v714, 1.0
          %v717 = vrcp.pop %v715
          %v718 = vmul.f32 1.0, %v717
          %v719 = vrcp.pop %v716
          %v720 = vmul.f32 1.0, %v719
          %v721 = vmul.f32 %v598, %v718
          %v722 = vmul.f32 %v601, %v720
          %v723 = vmul.f32 %v721, %v703
          %v724 = vmul.f32 %v722, %v706
          %v725 = vpack.c.bf16 %v724, %v723
          %v726 = vld [vmem:[%s473] sm:$0xf]
          %v727 = vld [vmem:[%s473 + $0x4] sm:$0xf]
          %v728 = vld [vmem:[%s473 + $0x8] sm:$0xf]
          %v729 = vld [vmem:[%s473 + $0xc] sm:$0xf]
          %v730 = vld [vmem:[%s473 + $0x10] sm:$0xf]
          %v731 = vld [vmem:[%s473 + $0x14] sm:$0xf]
          %v732 = vld [vmem:[%s473 + $0x18] sm:$0xf]
          %v733 = vld [vmem:[%s473 + $0x1c] sm:$0xf]
          %v734 = vld [vmem:[%s473 + $0x20] sm:$0xf]
          %v735 = vld [vmem:[%s473 + $0x24] sm:$0xf]
          %v736 = vld [vmem:[%s473 + $0x28] sm:$0xf]
          %v737 = vld [vmem:[%s473 + $0x2c] sm:$0xf]
          %v738 = vld [vmem:[%s473 + $0x30] sm:$0xf]
          %v739 = vld [vmem:[%s473 + $0x34] sm:$0xf]
          %v740 = vld [vmem:[%s473 + $0x38] sm:$0xf]
          %v741 = vld [vmem:[%s473 + $0x3c] sm:$0xf]
          %v758 = vunpack.c.l.b16 %v726
          %v759 = vunpack.c.l.b16 %v727
          %v760 = vunpack.c.l.b16 %v728
          %v761 = vunpack.c.l.b16 %v729
          %v762 = vunpack.c.l.b16 %v730
          %v763 = vunpack.c.l.b16 %v731
          %v764 = vunpack.c.l.b16 %v732
          %v765 = vunpack.c.l.b16 %v733
          %v766 = vunpack.c.l.b16 %v734
          %v767 = vunpack.c.l.b16 %v735
          %v768 = vunpack.c.l.b16 %v736
          %v769 = vunpack.c.l.b16 %v737
          %v770 = vunpack.c.l.b16 %v738
          %v771 = vunpack.c.l.b16 %v739
          %v772 = vunpack.c.l.b16 %v740
          %v773 = vunpack.c.l.b16 %v741
          %v774 = vpack.c.b16 %v759, %v758
          %v775 = vpack.c.b16 %v761, %v760
          %v776 = vpack.c.b16 %v763, %v762
          %v777 = vpack.c.b16 %v765, %v764
          %v778 = vpack.c.b16 %v767, %v766
          %v779 = vpack.c.b16 %v769, %v768
          %v780 = vpack.c.b16 %v771, %v770
          %v781 = vpack.c.b16 %v773, %v772
          %790 = vmatprep.subr.bf16.mxu0 0
          %791 = vmatpush1.bf16.msra.mxu0 %v774
          %792 = vmatprep.subr.bf16.mxu0 0
          %793 = vmatpush1.bf16.msra.mxu0 %v775
          %794 = vmatprep.subr.bf16.mxu0 0
          %795 = vmatpush1.bf16.msra.mxu0 %v776
          %796 = vmatprep.subr.bf16.mxu0 0
          %797 = vmatpush1.bf16.msra.mxu0 %v777
          %798 = vmatprep.subr.bf16.mxu0 0
          %799 = vmatpush1.bf16.msra.mxu0 %v778
          %800 = vmatprep.subr.bf16.mxu0 0
          %801 = vmatpush1.bf16.msra.mxu0 %v779
          %802 = vmatprep.subr.bf16.mxu0 0
          %803 = vmatpush1.bf16.msra.mxu0 %v780
          %804 = vmatprep.subr.bf16.mxu0 0
          %805 = vmatpush1.bf16.msra.mxu0 %v781
          %806 = vmatprep.subr.bf16.mxu0 0
          %807 = vmatpush1.bf16.msra.mxu0 0
          %808 = vmatprep.subr.bf16.mxu0 0
          %809 = vmatpush1.bf16.msra.mxu0 0
          %810 = vmatprep.subr.bf16.mxu0 0
          %811 = vmatpush1.bf16.msra.mxu0 0
          %812 = vmatprep.subr.bf16.mxu0 0
          %813 = vmatpush1.bf16.msra.mxu0 0
          %814 = vmatprep.subr.bf16.mxu0 0
          %815 = vmatpush1.bf16.msra.mxu0 0
          %816 = vmatprep.subr.bf16.mxu0 0
          %817 = vmatpush1.bf16.msra.mxu0 0
          %818 = vmatprep.subr.bf16.mxu0 0
          %819 = vmatpush1.bf16.msra.mxu0 0
          %820 = vmatprep.subr.bf16.mxu0 0
          %821 = vmatpush1.bf16.msra.mxu0 0
          %822 = vmatprep.mubr.bf16.mxu0 0
          %823 = vmatmul.mubr.bf16.gmra.mrb[0].mxu0 %v725
          %v824 = vpop.f32.mrb[0].mxu0
          %v825 = vadd.f32 0.0, %v824
          %v826 = vpop.f32.mrb[0].mxu0
          %v827 = vpop.f32.mrb[0].mxu0
          %v828 = vadd.f32 0.0, %v827
          %v829 = vpop.f32.mrb[0].mxu0
          %830 = vdwg.mxu0
          %v831 = vld [vmem:[%s446] sm:$0xff]
          %v832 = vld [vmem:[%s446 + $0x8] sm:$0xff]
          %v833 = vstv %s490
          %vm834 = vcmp.eq.s32.totalorder %v831, %v833
          %vm835 = vcmp.eq.s32.totalorder %v832, %v833
          %v836 = vsel %vm834, 1, 0
          %v837 = vsel %vm835, 1, 0
          %v838 = vcvt.s32.f32 %v836
          %v839 = vcvt.s32.f32 %v837
          %v840 = vld [vmem:[%s452] sm:$0xff]
          %v841 = vld [vmem:[%s452 + $0x8] sm:$0xff]
          %v842 = vmul.f32 %v840, %v838
          %v843 = vmul.f32 %v841, %v839
          %vm844 = vcmask 15360
          %v845 = vsel %vm844, %v842, 0.0
          %846 = vadd.xlane.f32.xlu0 %v845
          %v847 = vpop.xlane.xlu0 %846
          %v848 = vsel %vm844, %v843, 0.0
          %849 = vadd.xlane.f32.xlu0 %v848
          %v850 = vpop.xlane.xlu0 %849
          %v851 = vld [vmem:[#allocation5] sm:$0xff]
          %v852 = vld [vmem:[#allocation5 + $0x8] sm:$0xff]
          %v853 = vmul.f32 %v847, %v825
          %v854 = vmul.f32 %v850, %v828
          %v855 = vadd.f32 %v851, %v853
          %v856 = vadd.f32 %v852, %v854
          %857 = vst [vmem:[#allocation5] sm:$0xff] %v855
          %858 = vst [vmem:[#allocation5 + $0x8] sm:$0xff] %v856
        $region64: #{moe_forward.1} parent=55 // pred_fallthru
          _
        %p859 = scmp.eq.s32.totalorder %s38, 5
        // Predicated region
        $region65: #{moe_forward.1} parent=55 // pred_check
          %p860 = pneg %p859
        $region66: #{moe_forward.1} parent=55 // pred_check_branch
          %862 = sbr.rel (%p860) target = $region68
        $region67: #{moe_forward.1} parent=55 // pred_region
          %v863 = vld [vmem:[%s440] sm:$0xf]
          %v864 = vld [vmem:[%s440 + $0x4] sm:$0xf]
          %v865 = vld [vmem:[%s8] sm:$0xff]
          %v866 = vld [vmem:[%s8 + $0x8] sm:$0xff]
          %v867 = vld [vmem:[%s8 + $0x10] sm:$0xff]
          %v868 = vld [vmem:[%s8 + $0x18] sm:$0xff]
          %v869 = vld [vmem:[%s8 + $0x20] sm:$0xff]
          %v870 = vld [vmem:[%s8 + $0x28] sm:$0xff]
          %v871 = vld [vmem:[%s8 + $0x30] sm:$0xff]
          %v872 = vld [vmem:[%s8 + $0x38] sm:$0xff]
          %v873 = vld [vmem:[%s8 + $0x40] sm:$0xff]
          %v874 = vld [vmem:[%s8 + $0x48] sm:$0xff]
          %v875 = vld [vmem:[%s8 + $0x50] sm:$0xff]
          %v876 = vld [vmem:[%s8 + $0x58] sm:$0xff]
          %v877 = vld [vmem:[%s8 + $0x60] sm:$0xff]
          %v878 = vld [vmem:[%s8 + $0x68] sm:$0xff]
          %v879 = vld [vmem:[%s8 + $0x70] sm:$0xff]
          %v880 = vld [vmem:[%s8 + $0x78] sm:$0xff]
          %v883 = vunpack.c.l.b16 %v863
          %v884 = vunpack.c.l.b16 %v864
          %v885 = vpack.c.b16 %v884, %v883
          %v903 = vunpack.c.l.b16 %v865
          %v904 = vunpack.c.h.b16 %v865
          %v905 = vunpack.c.l.b16 %v866
          %v906 = vunpack.c.h.b16 %v866
          %v907 = vunpack.c.l.b16 %v867
          %v908 = vunpack.c.h.b16 %v867
          %v909 = vunpack.c.l.b16 %v868
          %v910 = vunpack.c.h.b16 %v868
          %v911 = vunpack.c.l.b16 %v869
          %v912 = vunpack.c.h.b16 %v869
          %v913 = vunpack.c.l.b16 %v870
          %v914 = vunpack.c.h.b16 %v870
          %v915 = vunpack.c.l.b16 %v871
          %v916 = vunpack.c.h.b16 %v871
          %v917 = vunpack.c.l.b16 %v872
          %v918 = vunpack.c.h.b16 %v872
          %v919 = vunpack.c.l.b16 %v873
          %v920 = vunpack.c.h.b16 %v873
          %v921 = vunpack.c.l.b16 %v874
          %v922 = vunpack.c.h.b16 %v874
          %v923 = vunpack.c.l.b16 %v875
          %v924 = vunpack.c.h.b16 %v875
          %v925 = vunpack.c.l.b16 %v876
          %v926 = vunpack.c.h.b16 %v876
          %v927 = vunpack.c.l.b16 %v877
          %v928 = vunpack.c.h.b16 %v877
          %v929 = vunpack.c.l.b16 %v878
          %v930 = vunpack.c.h.b16 %v878
          %v931 = vunpack.c.l.b16 %v879
          %v932 = vunpack.c.h.b16 %v879
          %v933 = vunpack.c.l.b16 %v880
          %v934 = vunpack.c.h.b16 %v880
          %v935 = vpack.c.b16 %v905, %v903
          %v936 = vpack.c.b16 %v906, %v904
          %v937 = vpack.c.b16 %v909, %v907
          %v938 = vpack.c.b16 %v910, %v908
          %v939 = vpack.c.b16 %v913, %v911
          %v940 = vpack.c.b16 %v914, %v912
          %v941 = vpack.c.b16 %v917, %v915
          %v942 = vpack.c.b16 %v918, %v916
          %v943 = vpack.c.b16 %v921, %v919
          %v944 = vpack.c.b16 %v922, %v920
          %v945 = vpack.c.b16 %v925, %v923
          %v946 = vpack.c.b16 %v926, %v924
          %v947 = vpack.c.b16 %v929, %v927
          %v948 = vpack.c.b16 %v930, %v928
          %v949 = vpack.c.b16 %v933, %v931
          %v950 = vpack.c.b16 %v934, %v932
          %967 = vmatprep.subr.bf16.mxu0 %v936
          %968 = vmatpush1.bf16.msra.mxu0 %v935
          %969 = vmatprep.subr.bf16.mxu0 %v938
          %970 = vmatpush1.bf16.msra.mxu0 %v937
          %971 = vmatprep.subr.bf16.mxu0 %v940
          %972 = vmatpush1.bf16.msra.mxu0 %v939
          %973 = vmatprep.subr.bf16.mxu0 %v942
          %974 = vmatpush1.bf16.msra.mxu0 %v941
          %975 = vmatprep.subr.bf16.mxu0 %v944
          %976 = vmatpush1.bf16.msra.mxu0 %v943
          %977 = vmatprep.subr.bf16.mxu0 %v946
          %978 = vmatpush1.bf16.msra.mxu0 %v945
          %979 = vmatprep.subr.bf16.mxu0 %v948
          %980 = vmatpush1.bf16.msra.mxu0 %v947
          %981 = vmatprep.subr.bf16.mxu0 %v950
          %982 = vmatpush1.bf16.msra.mxu0 %v949
          %983 = vmatprep.subr.bf16.mxu0 0
          %984 = vmatpush1.bf16.msra.mxu0 0
          %985 = vmatprep.subr.bf16.mxu0 0
          %986 = vmatpush1.bf16.msra.mxu0 0
          %987 = vmatprep.subr.bf16.mxu0 0
          %988 = vmatpush1.bf16.msra.mxu0 0
          %989 = vmatprep.subr.bf16.mxu0 0
          %990 = vmatpush1.bf16.msra.mxu0 0
          %991 = vmatprep.subr.bf16.mxu0 0
          %992 = vmatpush1.bf16.msra.mxu0 0
          %993 = vmatprep.subr.bf16.mxu0 0
          %994 = vmatpush1.bf16.msra.mxu0 0
          %995 = vmatprep.subr.bf16.mxu0 0
          %996 = vmatpush1.bf16.msra.mxu0 0
          %997 = vmatprep.subr.bf16.mxu0 0
          %998 = vmatpush1.bf16.msra.mxu0 0
          %999 = vmatprep.mubr.bf16.mxu0 0
          %1000 = vmatmul.mubr.bf16.gmra.mrb[0].mxu0 %v885
          %v1001 = vpop.f32.mrb[0].mxu0
          %v1002 = vadd.f32 0.0, %v1001
          %v1003 = vpop.f32.mrb[0].mxu0
          %v1004 = vadd.f32 0.0, %v1003
          %v1005 = vpop.f32.mrb[0].mxu0
          %v1006 = vadd.f32 0.0, %v1005
          %v1007 = vpop.f32.mrb[0].mxu0
          %v1008 = vadd.f32 0.0, %v1007
          %1009 = vdwg.mxu0
          %v1010 = vld [vmem:[%s9] sm:$0xff]
          %v1011 = vld [vmem:[%s9 + $0x8] sm:$0xff]
          %v1012 = vld [vmem:[%s9 + $0x10] sm:$0xff]
          %v1013 = vld [vmem:[%s9 + $0x18] sm:$0xff]
          %v1014 = vld [vmem:[%s9 + $0x20] sm:$0xff]
          %v1015 = vld [vmem:[%s9 + $0x28] sm:$0xff]
          %v1016 = vld [vmem:[%s9 + $0x30] sm:$0xff]
          %v1017 = vld [vmem:[%s9 + $0x38] sm:$0xff]
          %v1018 = vld [vmem:[%s9 + $0x40] sm:$0xff]
          %v1019 = vld [vmem:[%s9 + $0x48] sm:$0xff]
          %v1020 = vld [vmem:[%s9 + $0x50] sm:$0xff]
          %v1021 = vld [vmem:[%s9 + $0x58] sm:$0xff]
          %v1022 = vld [vmem:[%s9 + $0x60] sm:$0xff]
          %v1023 = vld [vmem:[%s9 + $0x68] sm:$0xff]
          %v1024 = vld [vmem:[%s9 + $0x70] sm:$0xff]
          %v1025 = vld [vmem:[%s9 + $0x78] sm:$0xff]
          %v1042 = vunpack.c.l.b16 %v1010
          %v1043 = vunpack.c.h.b16 %v1010
          %v1044 = vunpack.c.l.b16 %v1011
          %v1045 = vunpack.c.h.b16 %v1011
          %v1046 = vunpack.c.l.b16 %v1012
          %v1047 = vunpack.c.h.b16 %v1012
          %v1048 = vunpack.c.l.b16 %v1013
          %v1049 = vunpack.c.h.b16 %v1013
          %v1050 = vunpack.c.l.b16 %v1014
          %v1051 = vunpack.c.h.b16 %v1014
          %v1052 = vunpack.c.l.b16 %v1015
          %v1053 = vunpack.c.h.b16 %v1015
          %v1054 = vunpack.c.l.b16 %v1016
          %v1055 = vunpack.c.h.b16 %v1016
          %v1056 = vunpack.c.l.b16 %v1017
          %v1057 = vunpack.c.h.b16 %v1017
          %v1058 = vunpack.c.l.b16 %v1018
          %v1059 = vunpack.c.h.b16 %v1018
          %v1060 = vunpack.c.l.b16 %v1019
          %v1061 = vunpack.c.h.b16 %v1019
          %v1062 = vunpack.c.l.b16 %v1020
          %v1063 = vunpack.c.h.b16 %v1020
          %v1064 = vunpack.c.l.b16 %v1021
          %v1065 = vunpack.c.h.b16 %v1021
          %v1066 = vunpack.c.l.b16 %v1022
          %v1067 = vunpack.c.h.b16 %v1022
          %v1068 = vunpack.c.l.b16 %v1023
          %v1069 = vunpack.c.h.b16 %v1023
          %v1070 = vunpack.c.l.b16 %v1024
          %v1071 = vunpack.c.h.b16 %v1024
          %v1072 = vunpack.c.l.b16 %v1025
          %v1073 = vunpack.c.h.b16 %v1025
          %v1074 = vpack.c.b16 %v1044, %v1042
          %v1075 = vpack.c.b16 %v1045, %v1043
          %v1076 = vpack.c.b16 %v1048, %v1046
          %v1077 = vpack.c.b16 %v1049, %v1047
          %v1078 = vpack.c.b16 %v1052, %v1050
          %v1079 = vpack.c.b16 %v1053, %v1051
          %v1080 = vpack.c.b16 %v1056, %v1054
          %v1081 = vpack.c.b16 %v1057, %v1055
          %v1082 = vpack.c.b16 %v1060, %v1058
          %v1083 = vpack.c.b16 %v1061, %v1059
          %v1084 = vpack.c.b16 %v1064, %v1062
          %v1085 = vpack.c.b16 %v1065, %v1063
          %v1086 = vpack.c.b16 %v1068, %v1066
          %v1087 = vpack.c.b16 %v1069, %v1067
          %v1088 = vpack.c.b16 %v1072, %v1070
          %v1089 = vpack.c.b16 %v1073, %v1071
          %1106 = vmatprep.subr.bf16.mxu0 %v1075
          %1107 = vmatpush1.bf16.msra.mxu0 %v1074
          %1108 = vmatprep.subr.bf16.mxu0 %v1077
          %1109 = vmatpush1.bf16.msra.mxu0 %v1076
          %1110 = vmatprep.subr.bf16.mxu0 %v1079
          %1111 = vmatpush1.bf16.msra.mxu0 %v1078
          %1112 = vmatprep.subr.bf16.mxu0 %v1081
          %1113 = vmatpush1.bf16.msra.mxu0 %v1080
          %1114 = vmatprep.subr.bf16.mxu0 %v1083
          %1115 = vmatpush1.bf16.msra.mxu0 %v1082
          %1116 = vmatprep.subr.bf16.mxu0 %v1085
          %1117 = vmatpush1.bf16.msra.mxu0 %v1084
          %1118 = vmatprep.subr.bf16.mxu0 %v1087
          %1119 = vmatpush1.bf16.msra.mxu0 %v1086
          %1120 = vmatprep.subr.bf16.mxu0 %v1089
          %1121 = vmatpush1.bf16.msra.mxu0 %v1088
          %1122 = vmatprep.subr.bf16.mxu0 0
          %1123 = vmatpush1.bf16.msra.mxu0 0
          %1124 = vmatprep.subr.bf16.mxu0 0
          %1125 = vmatpush1.bf16.msra.mxu0 0
          %1126 = vmatprep.subr.bf16.mxu0 0
          %1127 = vmatpush1.bf16.msra.mxu0 0
          %1128 = vmatprep.subr.bf16.mxu0 0
          %1129 = vmatpush1.bf16.msra.mxu0 0
          %1130 = vmatprep.subr.bf16.mxu0 0
          %1131 = vmatpush1.bf16.msra.mxu0 0
          %1132 = vmatprep.subr.bf16.mxu0 0
          %1133 = vmatpush1.bf16.msra.mxu0 0
          %1134 = vmatprep.subr.bf16.mxu0 0
          %1135 = vmatpush1.bf16.msra.mxu0 0
          %1136 = vmatprep.subr.bf16.mxu0 0
          %1137 = vmatpush1.bf16.msra.mxu0 0
          %1138 = vmatprep.mubr.bf16.mxu0 0
          %1139 = vmatmul.mubr.bf16.gmra.mrb[0].mxu0 %v885
          %v1140 = vpop.f32.mrb[0].mxu0
          %v1141 = vadd.f32 0.0, %v1140
          %v1142 = vpop.f32.mrb[0].mxu0
          %v1143 = vadd.f32 0.0, %v1142
          %v1144 = vpop.f32.mrb[0].mxu0
          %v1145 = vadd.f32 0.0, %v1144
          %v1146 = vpop.f32.mrb[0].mxu0
          %v1147 = vadd.f32 0.0, %v1146
          %1148 = vdwg.mxu0
          %v1149 = vxor.u32 %v1002, 2147483648
          %v1150 = vxor.u32 %v1004, 2147483648
          %v1151 = vxor.u32 %v1006, 2147483648
          %v1152 = vxor.u32 %v1008, 2147483648
          %v1153 = vmul.f32 %v1149, 1.442695
          %v1154 = vpow.pop %v1153
          %v1155 = vmul.f32 %v1150, 1.442695
          %v1156 = vpow.pop %v1155
          %v1157 = vmul.f32 %v1151, 1.442695
          %v1158 = vpow.pop %v1157
          %v1159 = vmul.f32 %v1152, 1.442695
          %v1160 = vpow.pop %v1159
          %v1161 = vadd.f32 %v1154, 1.0
          %v1162 = vadd.f32 %v1156, 1.0
          %v1163 = vadd.f32 %v1158, 1.0
          %v1164 = vadd.f32 %v1160, 1.0
          %v1165 = vrcp.pop %v1161
          %v1166 = vmul.f32 1.0, %v1165
          %v1167 = vrcp.pop %v1162
          %v1168 = vmul.f32 1.0, %v1167
          %v1169 = vrcp.pop %v1163
          %v1170 = vmul.f32 1.0, %v1169
          %v1171 = vrcp.pop %v1164
          %v1172 = vmul.f32 1.0, %v1171
          %v1173 = vmul.f32 %v1002, %v1166
          %v1174 = vmul.f32 %v1004, %v1168
          %v1175 = vmul.f32 %v1006, %v1170
          %v1176 = vmul.f32 %v1008, %v1172
          %v1177 = vmul.f32 %v1173, %v1141
          %v1178 = vmul.f32 %v1174, %v1143
          %v1179 = vmul.f32 %v1175, %v1145
          %v1180 = vmul.f32 %v1176, %v1147
          %v1181 = vld [vmem:[#allocation5] sm:$0xff]
          %v1182 = vld [vmem:[#allocation5 + $0x8] sm:$0xff]
          %v1183 = vpack.c.bf16 %v1179, %v1177
          %v1184 = vpack.c.bf16 %v1180, %v1178
          %v1185 = vld [vmem:[%s10] sm:$0xf]
          %v1186 = vld [vmem:[%s10 + $0x4] sm:$0xf]
          %v1187 = vld [vmem:[%s10 + $0x8] sm:$0xf]
          %v1188 = vld [vmem:[%s10 + $0xc] sm:$0xf]
          %v1189 = vld [vmem:[%s10 + $0x10] sm:$0xf]
          %v1190 = vld [vmem:[%s10 + $0x14] sm:$0xf]
          %v1191 = vld [vmem:[%s10 + $0x18] sm:$0xf]
          %v1192 = vld [vmem:[%s10 + $0x1c] sm:$0xf]
          %v1193 = vld [vmem:[%s10 + $0x20] sm:$0xf]
          %v1194 = vld [vmem:[%s10 + $0x24] sm:$0xf]
          %v1195 = vld [vmem:[%s10 + $0x28] sm:$0xf]
          %v1196 = vld [vmem:[%s10 + $0x2c] sm:$0xf]
          %v1197 = vld [vmem:[%s10 + $0x30] sm:$0xf]
          %v1198 = vld [vmem:[%s10 + $0x34] sm:$0xf]
          %v1199 = vld [vmem:[%s10 + $0x38] sm:$0xf]
          %v1200 = vld [vmem:[%s10 + $0x3c] sm:$0xf]
          %v1201 = vld [vmem:[%s10 + $0x40] sm:$0xf]
          %v1202 = vld [vmem:[%s10 + $0x44] sm:$0xf]
          %v1203 = vld [vmem:[%s10 + $0x48] sm:$0xf]
          %v1204 = vld [vmem:[%s10 + $0x4c] sm:$0xf]
          %v1205 = vld [vmem:[%s10 + $0x50] sm:$0xf]
          %v1206 = vld [vmem:[%s10 + $0x54] sm:$0xf]
          %v1207 = vld [vmem:[%s10 + $0x58] sm:$0xf]
          %v1208 = vld [vmem:[%s10 + $0x5c] sm:$0xf]
          %v1209 = vld [vmem:[%s10 + $0x60] sm:$0xf]
          %v1210 = vld [vmem:[%s10 + $0x64] sm:$0xf]
          %v1211 = vld [vmem:[%s10 + $0x68] sm:$0xf]
          %v1212 = vld [vmem:[%s10 + $0x6c] sm:$0xf]
          %v1213 = vld [vmem:[%s10 + $0x70] sm:$0xf]
          %v1214 = vld [vmem:[%s10 + $0x74] sm:$0xf]
          %v1215 = vld [vmem:[%s10 + $0x78] sm:$0xf]
          %v1216 = vld [vmem:[%s10 + $0x7c] sm:$0xf]
          %v1249 = vunpack.c.l.b16 %v1185
          %v1250 = vunpack.c.l.b16 %v1186
          %v1251 = vunpack.c.l.b16 %v1187
          %v1252 = vunpack.c.l.b16 %v1188
          %v1253 = vunpack.c.l.b16 %v1189
          %v1254 = vunpack.c.l.b16 %v1190
          %v1255 = vunpack.c.l.b16 %v1191
          %v1256 = vunpack.c.l.b16 %v1192
          %v1257 = vunpack.c.l.b16 %v1193
          %v1258 = vunpack.c.l.b16 %v1194
          %v1259 = vunpack.c.l.b16 %v1195
          %v1260 = vunpack.c.l.b16 %v1196
          %v1261 = vunpack.c.l.b16 %v1197
          %v1262 = vunpack.c.l.b16 %v1198
          %v1263 = vunpack.c.l.b16 %v1199
          %v1264 = vunpack.c.l.b16 %v1200
          %v1265 = vunpack.c.l.b16 %v1201
          %v1266 = vunpack.c.l.b16 %v1202
          %v1267 = vunpack.c.l.b16 %v1203
          %v1268 = vunpack.c.l.b16 %v1204
          %v1269 = vunpack.c.l.b16 %v1205
          %v1270 = vunpack.c.l.b16 %v1206
          %v1271 = vunpack.c.l.b16 %v1207
          %v1272 = vunpack.c.l.b16 %v1208
          %v1273 = vunpack.c.l.b16 %v1209
          %v1274 = vunpack.c.l.b16 %v1210
          %v1275 = vunpack.c.l.b16 %v1211
          %v1276 = vunpack.c.l.b16 %v1212
          %v1277 = vunpack.c.l.b16 %v1213
          %v1278 = vunpack.c.l.b16 %v1214
          %v1279 = vunpack.c.l.b16 %v1215
          %v1280 = vunpack.c.l.b16 %v1216
          %v1281 = vpack.c.b16 %v1250, %v1249
          %v1282 = vpack.c.b16 %v1252, %v1251
          %v1283 = vpack.c.b16 %v1254, %v1253
          %v1284 = vpack.c.b16 %v1256, %v1255
          %v1285 = vpack.c.b16 %v1258, %v1257
          %v1286 = vpack.c.b16 %v1260, %v1259
          %v1287 = vpack.c.b16 %v1262, %v1261
          %v1288 = vpack.c.b16 %v1264, %v1263
          %v1289 = vpack.c.b16 %v1266, %v1265
          %v1290 = vpack.c.b16 %v1268, %v1267
          %v1291 = vpack.c.b16 %v1270, %v1269
          %v1292 = vpack.c.b16 %v1272, %v1271
          %v1293 = vpack.c.b16 %v1274, %v1273
          %v1294 = vpack.c.b16 %v1276, %v1275
          %v1295 = vpack.c.b16 %v1278, %v1277
          %v1296 = vpack.c.b16 %v1280, %v1279
          %1313 = vmatprep.subr.bf16.mxu0 0
          %1314 = vmatpush1.bf16.msra.mxu0 %v1281
          %1315 = vmatprep.subr.bf16.mxu0 0
          %1316 = vmatpush1.bf16.msra.mxu0 %v1282
          %1317 = vmatprep.subr.bf16.mxu0 0
          %1318 = vmatpush1.bf16.msra.mxu0 %v1283
          %1319 = vmatprep.subr.bf16.mxu0 0
          %1320 = vmatpush1.bf16.msra.mxu0 %v1284
          %1321 = vmatprep.subr.bf16.mxu0 0
          %1322 = vmatpush1.bf16.msra.mxu0 %v1285
          %1323 = vmatprep.subr.bf16.mxu0 0
          %1324 = vmatpush1.bf16.msra.mxu0 %v1286
          %1325 = vmatprep.subr.bf16.mxu0 0
          %1326 = vmatpush1.bf16.msra.mxu0 %v1287
          %1327 = vmatprep.subr.bf16.mxu0 0
          %1328 = vmatpush1.bf16.msra.mxu0 %v1288
          %1329 = vmatprep.subr.bf16.mxu0 0
          %1330 = vmatpush1.bf16.msra.mxu0 %v1289
          %1331 = vmatprep.subr.bf16.mxu0 0
          %1332 = vmatpush1.bf16.msra.mxu0 %v1290
          %1333 = vmatprep.subr.bf16.mxu0 0
          %1334 = vmatpush1.bf16.msra.mxu0 %v1291
          %1335 = vmatprep.subr.bf16.mxu0 0
          %1336 = vmatpush1.bf16.msra.mxu0 %v1292
          %1337 = vmatprep.subr.bf16.mxu0 0
          %1338 = vmatpush1.bf16.msra.mxu0 %v1293
          %1339 = vmatprep.subr.bf16.mxu0 0
          %1340 = vmatpush1.bf16.msra.mxu0 %v1294
          %1341 = vmatprep.subr.bf16.mxu0 0
          %1342 = vmatpush1.bf16.msra.mxu0 %v1295
          %1343 = vmatprep.subr.bf16.mxu0 0
          %1344 = vmatpush1.bf16.msra.mxu0 %v1296
          %1345 = vmatprep.mubr.bf16.mxu0 %v1184
          %1346 = vmatmul.mubr.bf16.gmra.mrb[0].mxu0 %v1183
          %v1347 = vpop.f32.mrb[0].mxu0
          %v1348 = vadd.f32 0.0, %v1347
          %v1349 = vpop.f32.mrb[0].mxu0
          %v1350 = vpop.f32.mrb[0].mxu0
          %v1351 = vadd.f32 0.0, %v1350
          %v1352 = vpop.f32.mrb[0].mxu0
          %1353 = vdwg.mxu0
          %v1354 = vadd.f32 %v1181, %v1348
          %v1355 = vadd.f32 %v1182, %v1351
          %1356 = vst [vmem:[#allocation5] sm:$0xff] %v1354
          %1357 = vst [vmem:[#allocation5 + $0x8] sm:$0xff] %v1355
        $region68: #{moe_forward.1} parent=55 // pred_fallthru
          _
        // Predicated region
        $region69: #{moe_forward.1} parent=55 // pred_check
          %p1358 = pneg %p288
        $region70: #{moe_forward.1} parent=55 // pred_check_branch
          %1360 = sbr.rel (%p1358) target = $region72
        $region71: #{moe_forward.1} parent=55 // pred_region
          %s1361 = smul.u32 2, %s37
          %s1363 = ssub.s32 256, 256
          %1364 = vsyncadd [#allocation6], %s1363
          %s1365 = smul.addr %s1361, 128
          %s1366 = scalar_lea.hbm %s11, %s1365
          %s1367 = sshll.u32 [#allocation5], 4
          %s1368 = int_to_ptr.vmem [resolvable:$true] %s1367
          %1373 = dma.vmem_to_hbm [thread:$0]  %s1368, 256, %s1366, [#allocation6], 128, 128, 8
        $region72: #{moe_forward.1} parent=55 // pred_fallthru
          _
        // Predicated region
        $region73: #{moe_forward.1} parent=55 // pred_check
          %p1374 = pneg %p288
        $region74: #{moe_forward.1} parent=55 // pred_check_branch
          %1376 = sbr.rel (%p1374) target = $region76
        $region75: #{moe_forward.1} parent=55 // pred_region
          %1377 = dma.done [#allocation6], 256
        $region76: #{moe_forward.1} parent=55 // pred_fallthru
          _
      $region56: #{moe_forward.1} parent=5 // pred_fallthru
        _
      %p1378 = scmp.le.s32.totalorder 2, %s28
      // Predicated region
      $region77: #{moe_forward.1} parent=5 // pred_check
        %p1379 = pneg %p1378
      $region78: #{moe_forward.1} parent=5 // pred_check_branch
        %1381 = sbr.rel (%p1379) target = $region80
      $region79: #{moe_forward.1} parent=5 // pred_region
        %s1382 = ssub.s32 %s28, 2
      $region80: #{moe_forward.1} parent=5 // pred_fallthru
        _
    $region6: #{moe_forward.1} parent=1 // loop_footer
      %s32 = sadd.s32 1, %s28
    $region7: #{moe_forward.1} parent=1 // loop_footer_branch
      %27 = sbr.rel target = $region3
    $region8: #{moe_forward.1} parent=1 // loop_exit
      _
    %1383 = vsyncpa [#allocation6], 1
    %s1384 = scalar_lea.sflag [#allocation6], 1
    %1385 = vsyncpa %s1384, 1

</llo_original>
